<compile_context>
chip_gen: v5e
topology: v5e:2x2
jax: 0.10.0
libtpu: 0.0.40
codegen_flags: <defaults>
</compile_context>

<pallas_src>
import functools

import numpy as np
import jax
import jax.numpy as jnp
from jax import lax
from jax.experimental import pallas as pl
from jax.experimental.pallas import tpu as pltpu


def _round_up(x, m):
    return (x + m - 1) // m * m


def _compute_dtype_for(dtype):
    if dtype == jnp.bfloat16 or dtype == jnp.float32:
        return dtype
    # TODO(synk): integer inputs with |x| > 2^24 lose exactness through the f32
    # one-hot matmul; an exact integer gather path is not implemented.
    return jnp.float32


def _nearest_sep_kernel(x_ref, wsrc_ref, o_ref, *, hw, nw, src_h, compute_dtype):
    """Separable nearest gather.

    x_ref:    (bc_tile, H*W)      input rows (native dtype)
    wsrc_ref: (1, H*NW)  int32    flat source index for the width expansion
    o_ref:    (bc_tile, NH*NW)    lane-dense output rows
    """
    hnw = wsrc_ref.shape[1]
    # Build the block-diagonal width-selection one-hot in VMEM (no HBM traffic).
    k = lax.broadcasted_iota(jnp.int32, (hw, hnw), 0)
    sel = (k == wsrc_ref[...]).astype(compute_dtype)
    y = jnp.dot(x_ref[...].astype(compute_dtype), sel,
                preferred_element_type=jnp.float32).astype(o_ref.dtype)
    # Height expansion: static row gather realised as a lane-concat of the
    # width-expanded rows -> output stays fully lane-dense (unmasked stores).
    parts = [y[:, s * nw:(s + 1) * nw] for s in src_h]
    o_ref[...] = jnp.concatenate(parts, axis=-1)


def _nearest_kron_kernel(x_ref, src_ref, o_ref, *, hw, compute_dtype):
    """Full one-hot gather over a chunk of output pixels (fallback / big sizes).

    x_ref:   (bc_tile, H*W)
    src_ref: (1, col_tile) int32   flat source index per output pixel in chunk
    o_ref:   (bc_tile, col_tile)
    """
    cols = src_ref.shape[1]
    k = lax.broadcasted_iota(jnp.int32, (hw, cols), 0)
    sel = (k == src_ref[...]).astype(compute_dtype)
    o_ref[...] = jnp.dot(x_ref[...].astype(compute_dtype), sel,
                         preferred_element_type=jnp.float32).astype(o_ref.dtype)


# Remember (per configuration) whether the separable body lowered cleanly so a
# fallback is only attempted once.
_SEP_PATH_OK = {}


def upsample_nearest(x, scale_factor=None, scale_bias=0, size=None,
                     mode='nearest', align_corners=None):
    """Pallas equivalent of vedastd Upsample.forward (mode='nearest', NCHW)."""
    if mode != 'nearest':
        # TODO(synk): only mode='nearest' (the module default) is implemented.
        raise NotImplementedError(f"mode={mode!r} is not implemented")
    assert (size is None) ^ (scale_factor is None)

    n, c, h, w = x.shape
    if size is not None:
        nh, nw = size
    else:
        nh = int(h * scale_factor + scale_bias)
        nw = int(w * scale_factor + scale_bias)
    if nh == h and nw == w:
        return x

    bc = n * c
    hw, nhnw = h * w, nh * nw
    compute_dtype = _compute_dtype_for(x.dtype)
    item = jnp.dtype(x.dtype).itemsize

    # TODO(synk): very large spatial inputs need a manual-DMA / replication
    # variant; the in-VMEM one-hot expansion is capped here.
    assert hw <= 8192, "H*W too large for the one-hot gather kernel"

    # ---- output-pixel (column) chunking keeps the selection block small ----
    sel_budget = 4 * 1024 * 1024
    max_cols = max(128, (sel_budget // (hw * 4)) // 128 * 128)
    col_tile = nhnw if nhnw <= max_cols else max_cols
    single_chunk = (col_tile == nhnw)

    # ---- N*C row tiling: fit VMEM but keep ~>=8 grid steps for pipelining
    #      and dual-TensorCore sharding on v7x ----
    bytes_per_row = 2 * hw * item + 2 * col_tile * item + 8 * col_tile
    tile_budget = 12 * 1024 * 1024
    budget_tile = max(8, tile_budget // bytes_per_row)
    target_tile = _round_up(max(1, pl.cdiv(bc, 8)), 8)
    bc_tile = min(budget_tile, target_tile)
    if bc_tile >= 256:
        bc_tile = bc_tile // 256 * 256      # clean 256x256 MXU passes
    else:
        bc_tile = max(8, bc_tile // 8 * 8)
    if bc <= bc_tile:
        bc_tile = bc                        # single full-extent block

    # Free reshape; input stays in its native dtype (no wrapper-side cast/copy).
    xf = x.reshape(bc, hw)
    out_shape = jax.ShapeDtypeStruct((bc, nhnw), x.dtype)

    # Static nearest source indices (tiny int32 vectors, built host-side).
    sw_idx = (np.arange(nw) * w) // nw                  # floor(ow * W / NW)
    sh_idx = (np.arange(nh) * h) // nh                  # floor(oh * H / NH)

    def run_sep():
        wsrc = (np.arange(h)[:, None] * w + sw_idx[None, :]
                ).reshape(1, h * nw).astype(np.int32)
        kern = functools.partial(_nearest_sep_kernel, hw=hw, nw=nw,
                                 src_h=tuple(int(v) for v in sh_idx),
                                 compute_dtype=compute_dtype)
        return pl.pallas_call(
            kern,
            out_shape=out_shape,
            grid=(pl.cdiv(bc, bc_tile),),
            in_specs=[
                pl.BlockSpec((bc_tile, hw), lambda i: (i, 0)),
                pl.BlockSpec((1, h * nw), lambda i: (0, 0)),
            ],
            out_specs=pl.BlockSpec((bc_tile, nhnw), lambda i: (i, 0)),
            compiler_params=pltpu.CompilerParams(
                dimension_semantics=("parallel",),
                vmem_limit_bytes=32 * 1024 * 1024,
            ),
        )(xf, jnp.asarray(wsrc))

    def run_kron():
        src = (sh_idx[:, None] * w + sw_idx[None, :]
               ).reshape(1, nhnw).astype(np.int32)
        kern = functools.partial(_nearest_kron_kernel, hw=hw,
                                 compute_dtype=compute_dtype)
        return pl.pallas_call(
            kern,
            out_shape=out_shape,
            grid=(pl.cdiv(bc, bc_tile), pl.cdiv(nhnw, col_tile)),
            in_specs=[
                pl.BlockSpec((bc_tile, hw), lambda i, j: (i, 0)),
                pl.BlockSpec((1, col_tile), lambda i, j: (0, j)),
            ],
            out_specs=pl.BlockSpec((bc_tile, col_tile), lambda i, j: (i, j)),
            compiler_params=pltpu.CompilerParams(
                dimension_semantics=("parallel", "parallel"),
                vmem_limit_bytes=32 * 1024 * 1024,
            ),
        )(xf, jnp.asarray(src))

    cfg = (h, w, nh, nw, str(x.dtype))
    use_sep = (single_chunk and nh <= 256 and h * nw <= max_cols
               and _SEP_PATH_OK.get(cfg, True))
    if use_sep:
        try:
            out = run_sep()
        except Exception:
            # Graceful fallback if the separable body fails to lower on this
            # toolchain (only effective when called eagerly, as here).
            _SEP_PATH_OK[cfg] = False
            out = run_kron()
    else:
        out = run_kron()

    return out.reshape(n, c, nh, nw)


class Upsample:
    """Mirror of the vedastd Upsample module (forward pass only)."""

    def __init__(self, size=None, scale_factor=None, scale_bias=0,
                 mode='nearest', align_corners=None):
        assert (size is None) ^ (scale_factor is None)
        self.size = size
        self.scale_factor = scale_factor
        self.scale_bias = scale_bias
        self.mode = mode
        self.align_corners = align_corners

    def __call__(self, x):
        return upsample_nearest(x, scale_factor=self.scale_factor,
                                scale_bias=self.scale_bias, size=self.size,
                                mode=self.mode, align_corners=self.align_corners)


if __name__ == "__main__":
    key = jax.random.PRNGKey(0)

    # Module config equivalent: Upsample(scale_factor=2, scale_bias=0, mode='nearest')
    N, C, H, W = 2, 4, 16, 16
    x = jax.random.normal(key, (N, C, H, W), dtype=jnp.float32)
    up = Upsample(scale_factor=2, scale_bias=0, mode='nearest')
    y = jax.block_until_ready(up(x))
    ref = jnp.repeat(jnp.repeat(x, 2, axis=2), 2, axis=3)
    assert y.shape == (N, C, 2 * H, 2 * W)
    assert jnp.array_equal(y, ref), "mismatch vs nearest reference (scale path)"

    # size= path with a non-square input.
    x2 = jax.random.normal(jax.random.PRNGKey(1), (2, 8, 8, 12), dtype=jnp.float32)
    y2 = jax.block_until_ready(upsample_nearest(x2, size=(16, 24)))
    ref2 = jnp.repeat(jnp.repeat(x2, 2, axis=2), 2, axis=3)
    assert y2.shape == (2, 8, 16, 24)
    assert jnp.array_equal(y2, ref2), "mismatch vs nearest reference (size path)"

    # Non-integer scale + bf16 (general nearest gather).
    x3 = jax.random.normal(jax.random.PRNGKey(2), (2, 4, 16, 16), dtype=jnp.bfloat16)
    y3 = jax.block_until_ready(upsample_nearest(x3, size=(24, 20)))
    sh_i = (jnp.arange(24) * 16) // 24
    sw_i = (jnp.arange(20) * 16) // 20
    ref3 = x3[:, :, sh_i, :][:, :, :, sw_i]
    assert y3.shape == (2, 4, 24, 20)
    assert jnp.array_equal(y3, ref3), "mismatch vs nearest reference (non-integer scale)"

    print("KERNEL_OK")
</pallas_src>

<mosaic_0001>
module attributes {stable_mosaic.version = 11 : i64} {
  func.func @_nearest_sep_kernel(%arg0: i32, %arg1: memref<8x256xf32, #tpu.memory_space<vmem>>, %arg2: memref<1x512xi32, #tpu.memory_space<vmem>>, %arg3: memref<8x1024xf32, #tpu.memory_space<vmem>>) attributes {dimension_semantics = [#tpu.dimension_semantics<parallel>], iteration_bounds = array<i64: 1>, scalar_prefetch = 0 : i64, scratch_operands = 0 : i64, tpu.core_type = #tpu.core_type<tc>, window_params = [{transform_indices = @transform_0, window_bounds = array<i64: 8, 256>}, {pipeline_mode = #tpu.pipeline_mode<synchronous>, transform_indices = @transform_1, window_bounds = array<i64: 1, 512>}, {transform_indices = @transform_2, window_bounds = array<i64: 8, 1024>}]} {
    %0 = tpu.iota {dimensions = array<i32: 0>} : vector<256x512xi32>
    %c0 = arith.constant 0 : index
    %c0_0 = arith.constant 0 : index
    %1 = vector.load %arg2[%c0, %c0_0] : memref<1x512xi32, #tpu.memory_space<vmem>>, vector<1x512xi32>
    %2 = vector.broadcast %1 : vector<1x512xi32> to vector<256x512xi32>
    %3 = arith.cmpi eq, %0, %2 : vector<256x512xi32>
    %4 = arith.extui %3 : vector<256x512xi1> to vector<256x512xi32>
    %5 = arith.sitofp %4 : vector<256x512xi32> to vector<256x512xf32>
    %c0_1 = arith.constant 0 : index
    %c0_2 = arith.constant 0 : index
    %6 = vector.load %arg1[%c0_1, %c0_2] : memref<8x256xf32, #tpu.memory_space<vmem>>, vector<8x256xf32>
    %cst = arith.constant dense<0.000000e+00> : vector<8x512xf32>
    %7 = tpu.matmul %6, %5, %cst {dimension_numbers = #tpu.dot_dimension_numbers<[1], [0], [0], [1], [0, 0, 1, 1], [], []>} : vector<8x256xf32>, vector<256x512xf32>, vector<8x512xf32> -> vector<8x512xf32>
    %8 = vector.extract_strided_slice %7 {offsets = [0, 0], sizes = [8, 32], strides = [1, 1]} : vector<8x512xf32> to vector<8x32xf32>
    %9 = vector.extract_strided_slice %7 {offsets = [0, 0], sizes = [8, 32], strides = [1, 1]} : vector<8x512xf32> to vector<8x32xf32>
    %10 = vector.extract_strided_slice %7 {offsets = [0, 32], sizes = [8, 32], strides = [1, 1]} : vector<8x512xf32> to vector<8x32xf32>
    %11 = vector.extract_strided_slice %7 {offsets = [0, 32], sizes = [8, 32], strides = [1, 1]} : vector<8x512xf32> to vector<8x32xf32>
    %12 = vector.extract_strided_slice %7 {offsets = [0, 64], sizes = [8, 32], strides = [1, 1]} : vector<8x512xf32> to vector<8x32xf32>
    %13 = vector.extract_strided_slice %7 {offsets = [0, 64], sizes = [8, 32], strides = [1, 1]} : vector<8x512xf32> to vector<8x32xf32>
    %14 = vector.extract_strided_slice %7 {offsets = [0, 96], sizes = [8, 32], strides = [1, 1]} : vector<8x512xf32> to vector<8x32xf32>
    %15 = vector.extract_strided_slice %7 {offsets = [0, 96], sizes = [8, 32], strides = [1, 1]} : vector<8x512xf32> to vector<8x32xf32>
    %16 = vector.extract_strided_slice %7 {offsets = [0, 128], sizes = [8, 32], strides = [1, 1]} : vector<8x512xf32> to vector<8x32xf32>
    %17 = vector.extract_strided_slice %7 {offsets = [0, 128], sizes = [8, 32], strides = [1, 1]} : vector<8x512xf32> to vector<8x32xf32>
    %18 = vector.extract_strided_slice %7 {offsets = [0, 160], sizes = [8, 32], strides = [1, 1]} : vector<8x512xf32> to vector<8x32xf32>
    %19 = vector.extract_strided_slice %7 {offsets = [0, 160], sizes = [8, 32], strides = [1, 1]} : vector<8x512xf32> to vector<8x32xf32>
    %20 = vector.extract_strided_slice %7 {offsets = [0, 192], sizes = [8, 32], strides = [1, 1]} : vector<8x512xf32> to vector<8x32xf32>
    %21 = vector.extract_strided_slice %7 {offsets = [0, 192], sizes = [8, 32], strides = [1, 1]} : vector<8x512xf32> to vector<8x32xf32>
    %22 = vector.extract_strided_slice %7 {offsets = [0, 224], sizes = [8, 32], strides = [1, 1]} : vector<8x512xf32> to vector<8x32xf32>
    %23 = vector.extract_strided_slice %7 {offsets = [0, 224], sizes = [8, 32], strides = [1, 1]} : vector<8x512xf32> to vector<8x32xf32>
    %24 = vector.extract_strided_slice %7 {offsets = [0, 256], sizes = [8, 32], strides = [1, 1]} : vector<8x512xf32> to vector<8x32xf32>
    %25 = vector.extract_strided_slice %7 {offsets = [0, 256], sizes = [8, 32], strides = [1, 1]} : vector<8x512xf32> to vector<8x32xf32>
    %26 = vector.extract_strided_slice %7 {offsets = [0, 288], sizes = [8, 32], strides = [1, 1]} : vector<8x512xf32> to vector<8x32xf32>
    %27 = vector.extract_strided_slice %7 {offsets = [0, 288], sizes = [8, 32], strides = [1, 1]} : vector<8x512xf32> to vector<8x32xf32>
    %28 = vector.extract_strided_slice %7 {offsets = [0, 320], sizes = [8, 32], strides = [1, 1]} : vector<8x512xf32> to vector<8x32xf32>
    %29 = vector.extract_strided_slice %7 {offsets = [0, 320], sizes = [8, 32], strides = [1, 1]} : vector<8x512xf32> to vector<8x32xf32>
    %30 = vector.extract_strided_slice %7 {offsets = [0, 352], sizes = [8, 32], strides = [1, 1]} : vector<8x512xf32> to vector<8x32xf32>
    %31 = vector.extract_strided_slice %7 {offsets = [0, 352], sizes = [8, 32], strides = [1, 1]} : vector<8x512xf32> to vector<8x32xf32>
    %32 = vector.extract_strided_slice %7 {offsets = [0, 384], sizes = [8, 32], strides = [1, 1]} : vector<8x512xf32> to vector<8x32xf32>
    %33 = vector.extract_strided_slice %7 {offsets = [0, 384], sizes = [8, 32], strides = [1, 1]} : vector<8x512xf32> to vector<8x32xf32>
    %34 = vector.extract_strided_slice %7 {offsets = [0, 416], sizes = [8, 32], strides = [1, 1]} : vector<8x512xf32> to vector<8x32xf32>
    %35 = vector.extract_strided_slice %7 {offsets = [0, 416], sizes = [8, 32], strides = [1, 1]} : vector<8x512xf32> to vector<8x32xf32>
    %36 = vector.extract_strided_slice %7 {offsets = [0, 448], sizes = [8, 32], strides = [1, 1]} : vector<8x512xf32> to vector<8x32xf32>
    %37 = vector.extract_strided_slice %7 {offsets = [0, 448], sizes = [8, 32], strides = [1, 1]} : vector<8x512xf32> to vector<8x32xf32>
    %38 = vector.extract_strided_slice %7 {offsets = [0, 480], sizes = [8, 32], strides = [1, 1]} : vector<8x512xf32> to vector<8x32xf32>
    %39 = vector.extract_strided_slice %7 {offsets = [0, 480], sizes = [8, 32], strides = [1, 1]} : vector<8x512xf32> to vector<8x32xf32>
    %40 = tpu.concatenate %8, %9, %10, %11, %12, %13, %14, %15, %16, %17, %18, %19, %20, %21, %22, %23 in 1 : vector<8x32xf32>, vector<8x32xf32>, vector<8x32xf32>, vector<8x32xf32>, vector<8x32xf32>, vector<8x32xf32>, vector<8x32xf32>, vector<8x32xf32>, vector<8x32xf32>, vector<8x32xf32>, vector<8x32xf32>, vector<8x32xf32>, vector<8x32xf32>, vector<8x32xf32>, vector<8x32xf32>, vector<8x32xf32> -> vector<8x512xf32>
    %41 = tpu.concatenate %24, %25, %26, %27, %28, %29, %30, %31, %32, %33, %34, %35, %36, %37, %38, %39 in 1 : vector<8x32xf32>, vector<8x32xf32>, vector<8x32xf32>, vector<8x32xf32>, vector<8x32xf32>, vector<8x32xf32>, vector<8x32xf32>, vector<8x32xf32>, vector<8x32xf32>, vector<8x32xf32>, vector<8x32xf32>, vector<8x32xf32>, vector<8x32xf32>, vector<8x32xf32>, vector<8x32xf32>, vector<8x32xf32> -> vector<8x512xf32>
    %42 = tpu.concatenate %40, %41 in 1 : vector<8x512xf32>, vector<8x512xf32> -> vector<8x1024xf32>
    %c0_3 = arith.constant 0 : index
    %c0_4 = arith.constant 0 : index
    %43 = vector.load %arg3[%c0_3, %c0_4] : memref<8x1024xf32, #tpu.memory_space<vmem>>, vector<8x1024xf32>
    tpu.vector_store %arg3[%c0_3, %c0_4], %42 {strides = array<i32>} : memref<8x1024xf32, #tpu.memory_space<vmem>>, vector<8x1024xf32>,
    return
  }
  func.func @transform_0(%arg0: i32) -> (i32, i32) {
    %c0_i32 = arith.constant 0 : i32
    %c0_i32_0 = arith.constant 0 : i32
    return %arg0, %c0_i32 : i32, i32
  }
  func.func @transform_1(%arg0: i32) -> (i32, i32) {
    %c0_i32 = arith.constant 0 : i32
    %c0_i32_0 = arith.constant 0 : i32
    %c0_i32_1 = arith.constant 0 : i32
    return %c0_i32, %c0_i32_0 : i32, i32
  }
  func.func @transform_2(%arg0: i32) -> (i32, i32) {
    %c0_i32 = arith.constant 0 : i32
    %c0_i32_0 = arith.constant 0 : i32
    return %arg0, %c0_i32 : i32, i32
  }
}

module attributes {stable_mosaic.version = 11 : i64} {
  func.func @_nearest_kron_kernel(%arg0: i32, %arg1: i32, %arg2: memref<8x256xf32, #tpu.memory_space<vmem>>, %arg3: memref<1x1024xi32, #tpu.memory_space<vmem>>, %arg4: memref<8x1024xf32, #tpu.memory_space<vmem>>) attributes {dimension_semantics = [#tpu.dimension_semantics<parallel>, #tpu.dimension_semantics<parallel>], iteration_bounds = array<i64: 1, 1>, scalar_prefetch = 0 : i64, scratch_operands = 0 : i64, tpu.core_type = #tpu.core_type<tc>, window_params = [{transform_indices = @transform_0, window_bounds = array<i64: 8, 256>}, {transform_indices = @transform_1, window_bounds = array<i64: 1, 1024>}, {transform_indices = @transform_2, window_bounds = array<i64: 8, 1024>}]} {
    %0 = tpu.iota {dimensions = array<i32: 0>} : vector<256x1024xi32>
    %c0 = arith.constant 0 : index
    %c0_0 = arith.constant 0 : index
    %1 = vector.load %arg3[%c0, %c0_0] : memref<1x1024xi32, #tpu.memory_space<vmem>>, vector<1x1024xi32>
    %2 = vector.broadcast %1 : vector<1x1024xi32> to vector<256x1024xi32>
    %3 = arith.cmpi eq, %0, %2 : vector<256x1024xi32>
    %4 = arith.extui %3 : vector<256x1024xi1> to vector<256x1024xi32>
    %5 = arith.sitofp %4 : vector<256x1024xi32> to vector<256x1024xf32>
    %c0_1 = arith.constant 0 : index
    %c0_2 = arith.constant 0 : index
    %6 = vector.load %arg2[%c0_1, %c0_2] : memref<8x256xf32, #tpu.memory_space<vmem>>, vector<8x256xf32>
    %cst = arith.constant dense<0.000000e+00> : vector<8x1024xf32>
    %7 = tpu.matmul %6, %5, %cst {dimension_numbers = #tpu.dot_dimension_numbers<[1], [0], [0], [1], [0, 0, 1, 1], [], []>} : vector<8x256xf32>, vector<256x1024xf32>, vector<8x1024xf32> -> vector<8x1024xf32>
    %c0_3 = arith.constant 0 : index
    %c0_4 = arith.constant 0 : index
    %8 = vector.load %arg4[%c0_3, %c0_4] : memref<8x1024xf32, #tpu.memory_space<vmem>>, vector<8x1024xf32>
    tpu.vector_store %arg4[%c0_3, %c0_4], %7 {strides = array<i32>} : memref<8x1024xf32, #tpu.memory_space<vmem>>, vector<8x1024xf32>,
    return
  }
  func.func @transform_0(%arg0: i32, %arg1: i32) -> (i32, i32) {
    %c0_i32 = arith.constant 0 : i32
    %c0_i32_0 = arith.constant 0 : i32
    return %arg0, %c0_i32 : i32, i32
  }
  func.func @transform_1(%arg0: i32, %arg1: i32) -> (i32, i32) {
    %c0_i32 = arith.constant 0 : i32
    %c0_i32_0 = arith.constant 0 : i32
    return %c0_i32, %arg1 : i32, i32
  }
  func.func @transform_2(%arg0: i32, %arg1: i32) -> (i32, i32) {
    %c0_i32 = arith.constant 0 : i32
    return %arg0, %arg1 : i32, i32
  }
}

</mosaic_0001>

<llo_original>
// kernel: tpu_custom_call.1
$region0: #{tpu_custom_call.1}
  #allocation0 [shape = 'u32[]', space=smem, size = 0x4, offset = 0x4, fixed_abs, tag = 'smem constant byte address 0x4 - core index']
  #allocation1 [shape = 'u32[72,128]{1,0:T(1,128)}', space=vmem, size = 0x9000, scoped, tag = 'internal scratch']
  %s0 = inlined_call_operand.hbm [shape: f32[8,256], index: 0, kind: input, shape index: {}]
  %s1 = inlined_call_operand.hbm [shape: s32[1,512], index: 1, kind: input, shape index: {}]
  %s2 = inlined_call_operand.hbm [shape: f32[8,1024], index: 2, kind: output, shape index: {}]
  %s3 = sld [smem:[#allocation0]]
  $region26: #{tpu_custom_call.1} parent=0
    _
  %s5 = ssub.s32 1, %s3
  %s6 = scalar_select 0, %s5, %s3
  $region1: #{tpu_custom_call.1} parent=0
    #allocation2 [shape = 'u8[8192]{0}', space=vmem, size = 0x2000, scoped, tag = 'input window, operand 0, single buffered']
    #allocation3 [shape = 's32[1]{0}', space=sflag, size = 0x4, scoped, tag = 'scoped memory for tpu_custom_call.1']
    #allocation4 [shape = 's32[1]{0}', space=sflag, size = 0x4, scoped, tag = 'scoped memory for tpu_custom_call.1']
    #allocation5 [shape = 'u8[2048]{0}', space=vmem, size = 0x800, scoped, tag = 'input window, operand 1, single buffered']
    #allocation6 [shape = 's32[1]{0}', space=sflag, size = 0x4, scoped, tag = 'scoped memory for tpu_custom_call.1']
    #allocation7 [shape = 'u8[32768]{0}', space=vmem, size = 0x8000, scoped, tag = 'output window, operand 0, single buffered']
    %7 = vsyncpa [#allocation3], 0
    %8 = vsyncpa [#allocation6], 0
    %9 = vsyncpa [#allocation4], 0
    // Predicated region
    $region2: #{tpu_custom_call.1} parent=1 // pred_check
      _
    $region3: #{tpu_custom_call.1} parent=1 // pred_check_branch
      %11 = sbr.rel (0) target = $region5
    $region4: #{tpu_custom_call.1} parent=1 // pred_region
      %13 = vsyncadd [#allocation3], 0
      %s15 = sshll.u32 %s0, 4
      %s16 = int_to_ptr.hbm [resolvable:$true] %s15
      %s17 = sshll.u32 [#allocation2], 4
      %s18 = int_to_ptr.vmem [resolvable:$true] %s17
      %20 = dma.hbm_to_vmem [thread:$0]  %s16, 256, %s18, [#allocation3]
    $region5: #{tpu_custom_call.1} parent=1 // pred_fallthru
      _
    // Predicated region
    $region6: #{tpu_custom_call.1} parent=1 // pred_check
      _
    $region7: #{tpu_custom_call.1} parent=1 // pred_check_branch
      %22 = sbr.rel (0) target = $region9
    $region8: #{tpu_custom_call.1} parent=1 // pred_region
      %24 = vsyncadd [#allocation6], 0
      %s26 = sshll.u32 %s1, 4
      %s27 = int_to_ptr.hbm [resolvable:$true] %s26
      %s28 = sshll.u32 [#allocation5], 4
      %s29 = int_to_ptr.vmem [resolvable:$true] %s28
      %31 = dma.hbm_to_vmem [thread:$0]  %s27, 64, %s29, [#allocation6]
    $region9: #{tpu_custom_call.1} parent=1 // pred_fallthru
      _
    // Predicated region
    $region10: #{tpu_custom_call.1} parent=1 // pred_check
      _
    $region11: #{tpu_custom_call.1} parent=1 // pred_check_branch
      %33 = sbr.rel (0) target = $region13
    $region12: #{tpu_custom_call.1} parent=1 // pred_region
      %35 = dma.done [#allocation3], 256
    $region13: #{tpu_custom_call.1} parent=1 // pred_fallthru
      _
    // Predicated region
    $region14: #{tpu_custom_call.1} parent=1 // pred_check
      _
    $region15: #{tpu_custom_call.1} parent=1 // pred_check_branch
      %37 = sbr.rel (0) target = $region17
    $region16: #{tpu_custom_call.1} parent=1 // pred_region
      %39 = dma.done [#allocation6], 64
    $region17: #{tpu_custom_call.1} parent=1 // pred_fallthru
      _
    %v40 = vlaneseq
    %v41 = vshrl.u32 %v40, 7
    %v42 = vadd.s32 %v41, 8
    %v43 = vadd.s32 %v41, 16
    %v44 = vadd.s32 %v41, 24
    %v45 = vadd.s32 %v41, 32
    %v46 = vadd.s32 %v41, 40
    %v47 = vadd.s32 %v41, 48
    %v48 = vadd.s32 %v41, 56
    %v49 = vadd.s32 %v41, 64
    %v50 = vadd.s32 %v41, 72
    %v51 = vadd.s32 %v41, 80
    %v52 = vadd.s32 %v41, 88
    %v53 = vadd.s32 %v41, 96
    %v54 = vadd.s32 %v41, 104
    %v55 = vadd.s32 %v41, 112
    %v56 = vadd.s32 %v41, 120
    %v57 = vadd.s32 %v41, 128
    %v58 = vadd.s32 %v41, 136
    %v59 = vadd.s32 %v41, 144
    %v60 = vadd.s32 %v41, 152
    %v61 = vadd.s32 %v41, 160
    %v62 = vadd.s32 %v41, 168
    %v63 = vadd.s32 %v41, 176
    %v64 = vadd.s32 %v41, 184
    %v65 = vadd.s32 %v41, 192
    %v66 = vadd.s32 %v41, 200
    %v67 = vadd.s32 %v41, 208
    %v68 = vadd.s32 %v41, 216
    %v69 = vadd.s32 %v41, 224
    %v70 = vadd.s32 %v41, 232
    %v71 = vadd.s32 %v41, 240
    %v72 = vadd.s32 %v41, 248
    %v73 = vld [vmem:[#allocation5] sm:$0xf]
    %v74 = vperm.slane %v73, 0
    %v75 = vperm.slane %v73, 1
    %v76 = vperm.slane %v73, 2
    %v77 = vperm.slane %v73, 3
    %vm78 = vcmp.eq.s32.totalorder %v41, %v74
    %vm79 = vcmp.eq.s32.totalorder %v41, %v75
    %vm80 = vcmp.eq.s32.totalorder %v41, %v76
    %vm81 = vcmp.eq.s32.totalorder %v41, %v77
    %vm82 = vcmp.eq.s32.totalorder %v42, %v74
    %vm83 = vcmp.eq.s32.totalorder %v42, %v75
    %vm84 = vcmp.eq.s32.totalorder %v42, %v76
    %vm85 = vcmp.eq.s32.totalorder %v42, %v77
    %vm86 = vcmp.eq.s32.totalorder %v43, %v74
    %vm87 = vcmp.eq.s32.totalorder %v43, %v75
    %vm88 = vcmp.eq.s32.totalorder %v43, %v76
    %vm89 = vcmp.eq.s32.totalorder %v43, %v77
    %vm90 = vcmp.eq.s32.totalorder %v44, %v74
    %vm91 = vcmp.eq.s32.totalorder %v44, %v75
    %vm92 = vcmp.eq.s32.totalorder %v44, %v76
    %vm93 = vcmp.eq.s32.totalorder %v44, %v77
    %vm94 = vcmp.eq.s32.totalorder %v45, %v74
    %vm95 = vcmp.eq.s32.totalorder %v45, %v75
    %vm96 = vcmp.eq.s32.totalorder %v45, %v76
    %vm97 = vcmp.eq.s32.totalorder %v45, %v77
    %vm98 = vcmp.eq.s32.totalorder %v46, %v74
    %vm99 = vcmp.eq.s32.totalorder %v46, %v75
    %vm100 = vcmp.eq.s32.totalorder %v46, %v76
    %vm101 = vcmp.eq.s32.totalorder %v46, %v77
    %vm102 = vcmp.eq.s32.totalorder %v47, %v74
    %vm103 = vcmp.eq.s32.totalorder %v47, %v75
    %vm104 = vcmp.eq.s32.totalorder %v47, %v76
    %vm105 = vcmp.eq.s32.totalorder %v47, %v77
    %vm106 = vcmp.eq.s32.totalorder %v48, %v74
    %vm107 = vcmp.eq.s32.totalorder %v48, %v75
    %vm108 = vcmp.eq.s32.totalorder %v48, %v76
    %vm109 = vcmp.eq.s32.totalorder %v48, %v77
    %vm110 = vcmp.eq.s32.totalorder %v49, %v74
    %vm111 = vcmp.eq.s32.totalorder %v49, %v75
    %vm112 = vcmp.eq.s32.totalorder %v49, %v76
    %vm113 = vcmp.eq.s32.totalorder %v49, %v77
    %vm114 = vcmp.eq.s32.totalorder %v50, %v74
    %vm115 = vcmp.eq.s32.totalorder %v50, %v75
    %vm116 = vcmp.eq.s32.totalorder %v50, %v76
    %vm117 = vcmp.eq.s32.totalorder %v50, %v77
    %vm118 = vcmp.eq.s32.totalorder %v51, %v74
    %vm119 = vcmp.eq.s32.totalorder %v51, %v75
    %vm120 = vcmp.eq.s32.totalorder %v51, %v76
    %vm121 = vcmp.eq.s32.totalorder %v51, %v77
    %vm122 = vcmp.eq.s32.totalorder %v52, %v74
    %vm123 = vcmp.eq.s32.totalorder %v52, %v75
    %vm124 = vcmp.eq.s32.totalorder %v52, %v76
    %vm125 = vcmp.eq.s32.totalorder %v52, %v77
    %vm126 = vcmp.eq.s32.totalorder %v53, %v74
    %vm127 = vcmp.eq.s32.totalorder %v53, %v75
    %vm128 = vcmp.eq.s32.totalorder %v53, %v76
    %vm129 = vcmp.eq.s32.totalorder %v53, %v77
    %vm130 = vcmp.eq.s32.totalorder %v54, %v74
    %vm131 = vcmp.eq.s32.totalorder %v54, %v75
    %vm132 = vcmp.eq.s32.totalorder %v54, %v76
    %vm133 = vcmp.eq.s32.totalorder %v54, %v77
    %vm134 = vcmp.eq.s32.totalorder %v55, %v74
    %vm135 = vcmp.eq.s32.totalorder %v55, %v75
    %vm136 = vcmp.eq.s32.totalorder %v55, %v76
    %vm137 = vcmp.eq.s32.totalorder %v55, %v77
    %vm138 = vcmp.eq.s32.totalorder %v56, %v74
    %vm139 = vcmp.eq.s32.totalorder %v56, %v75
    %vm140 = vcmp.eq.s32.totalorder %v56, %v76
    %vm141 = vcmp.eq.s32.totalorder %v56, %v77
    %vm142 = vcmp.eq.s32.totalorder %v57, %v74
    %vm143 = vcmp.eq.s32.totalorder %v57, %v75
    %vm144 = vcmp.eq.s32.totalorder %v57, %v76
    %vm145 = vcmp.eq.s32.totalorder %v57, %v77
    %vm146 = vcmp.eq.s32.totalorder %v58, %v74
    %vm147 = vcmp.eq.s32.totalorder %v58, %v75
    %vm148 = vcmp.eq.s32.totalorder %v58, %v76
    %vm149 = vcmp.eq.s32.totalorder %v58, %v77
    %vm150 = vcmp.eq.s32.totalorder %v59, %v74
    %vm151 = vcmp.eq.s32.totalorder %v59, %v75
    %vm152 = vcmp.eq.s32.totalorder %v59, %v76
    %vm153 = vcmp.eq.s32.totalorder %v59, %v77
    %vm154 = vcmp.eq.s32.totalorder %v60, %v74
    %vm155 = vcmp.eq.s32.totalorder %v60, %v75
    %vm156 = vcmp.eq.s32.totalorder %v60, %v76
    %vm157 = vcmp.eq.s32.totalorder %v60, %v77
    %vm158 = vcmp.eq.s32.totalorder %v61, %v74
    %vm159 = vcmp.eq.s32.totalorder %v61, %v75
    %vm160 = vcmp.eq.s32.totalorder %v61, %v76
    %vm161 = vcmp.eq.s32.totalorder %v61, %v77
    %vm162 = vcmp.eq.s32.totalorder %v62, %v74
    %vm163 = vcmp.eq.s32.totalorder %v62, %v75
    %vm164 = vcmp.eq.s32.totalorder %v62, %v76
    %vm165 = vcmp.eq.s32.totalorder %v62, %v77
    %vm166 = vcmp.eq.s32.totalorder %v63, %v74
    %vm167 = vcmp.eq.s32.totalorder %v63, %v75
    %vm168 = vcmp.eq.s32.totalorder %v63, %v76
    %vm169 = vcmp.eq.s32.totalorder %v63, %v77
    %vm170 = vcmp.eq.s32.totalorder %v64, %v74
    %vm171 = vcmp.eq.s32.totalorder %v64, %v75
    %vm172 = vcmp.eq.s32.totalorder %v64, %v76
    %vm173 = vcmp.eq.s32.totalorder %v64, %v77
    %vm174 = vcmp.eq.s32.totalorder %v65, %v74
    %vm175 = vcmp.eq.s32.totalorder %v65, %v75
    %vm176 = vcmp.eq.s32.totalorder %v65, %v76
    %vm177 = vcmp.eq.s32.totalorder %v65, %v77
    %vm178 = vcmp.eq.s32.totalorder %v66, %v74
    %vm179 = vcmp.eq.s32.totalorder %v66, %v75
    %vm180 = vcmp.eq.s32.totalorder %v66, %v76
    %vm181 = vcmp.eq.s32.totalorder %v66, %v77
    %vm182 = vcmp.eq.s32.totalorder %v67, %v74
    %vm183 = vcmp.eq.s32.totalorder %v67, %v75
    %vm184 = vcmp.eq.s32.totalorder %v67, %v76
    %vm185 = vcmp.eq.s32.totalorder %v67, %v77
    %vm186 = vcmp.eq.s32.totalorder %v68, %v74
    %vm187 = vcmp.eq.s32.totalorder %v68, %v75
    %vm188 = vcmp.eq.s32.totalorder %v68, %v76
    %vm189 = vcmp.eq.s32.totalorder %v68, %v77
    %vm190 = vcmp.eq.s32.totalorder %v69, %v74
    %vm191 = vcmp.eq.s32.totalorder %v69, %v75
    %vm192 = vcmp.eq.s32.totalorder %v69, %v76
    %vm193 = vcmp.eq.s32.totalorder %v69, %v77
    %vm194 = vcmp.eq.s32.totalorder %v70, %v74
    %vm195 = vcmp.eq.s32.totalorder %v70, %v75
    %vm196 = vcmp.eq.s32.totalorder %v70, %v76
    %vm197 = vcmp.eq.s32.totalorder %v70, %v77
    %vm198 = vcmp.eq.s32.totalorder %v71, %v74
    %vm199 = vcmp.eq.s32.totalorder %v71, %v75
    %vm200 = vcmp.eq.s32.totalorder %v71, %v76
    %vm201 = vcmp.eq.s32.totalorder %v71, %v77
    %vm202 = vcmp.eq.s32.totalorder %v72, %v74
    %vm203 = vcmp.eq.s32.totalorder %v72, %v75
    %vm204 = vcmp.eq.s32.totalorder %v72, %v76
    %vm205 = vcmp.eq.s32.totalorder %v72, %v77
    %v206 = vsel %vm78, 1, 0
    %v207 = vsel %vm79, 1, 0
    %v208 = vsel %vm80, 1, 0
    %v209 = vsel %vm81, 1, 0
    %v210 = vsel %vm82, 1, 0
    %v211 = vsel %vm83, 1, 0
    %v212 = vsel %vm84, 1, 0
    %v213 = vsel %vm85, 1, 0
    %v214 = vsel %vm86, 1, 0
    %v215 = vsel %vm87, 1, 0
    %v216 = vsel %vm88, 1, 0
    %v217 = vsel %vm89, 1, 0
    %v218 = vsel %vm90, 1, 0
    %v219 = vsel %vm91, 1, 0
    %v220 = vsel %vm92, 1, 0
    %v221 = vsel %vm93, 1, 0
    %v222 = vsel %vm94, 1, 0
    %v223 = vsel %vm95, 1, 0
    %v224 = vsel %vm96, 1, 0
    %v225 = vsel %vm97, 1, 0
    %v226 = vsel %vm98, 1, 0
    %v227 = vsel %vm99, 1, 0
    %v228 = vsel %vm100, 1, 0
    %v229 = vsel %vm101, 1, 0
    %v230 = vsel %vm102, 1, 0
    %v231 = vsel %vm103, 1, 0
    %v232 = vsel %vm104, 1, 0
    %v233 = vsel %vm105, 1, 0
    %v234 = vsel %vm106, 1, 0
    %v235 = vsel %vm107, 1, 0
    %v236 = vsel %vm108, 1, 0
    %v237 = vsel %vm109, 1, 0
    %v238 = vsel %vm110, 1, 0
    %v239 = vsel %vm111, 1, 0
    %v240 = vsel %vm112, 1, 0
    %v241 = vsel %vm113, 1, 0
    %v242 = vsel %vm114, 1, 0
    %v243 = vsel %vm115, 1, 0
    %v244 = vsel %vm116, 1, 0
    %v245 = vsel %vm117, 1, 0
    %v246 = vsel %vm118, 1, 0
    %v247 = vsel %vm119, 1, 0
    %v248 = vsel %vm120, 1, 0
    %v249 = vsel %vm121, 1, 0
    %v250 = vsel %vm122, 1, 0
    %v251 = vsel %vm123, 1, 0
    %v252 = vsel %vm124, 1, 0
    %v253 = vsel %vm125, 1, 0
    %v254 = vsel %vm126, 1, 0
    %v255 = vsel %vm127, 1, 0
    %v256 = vsel %vm128, 1, 0
    %v257 = vsel %vm129, 1, 0
    %v258 = vsel %vm130, 1, 0
    %v259 = vsel %vm131, 1, 0
    %v260 = vsel %vm132, 1, 0
    %v261 = vsel %vm133, 1, 0
    %v262 = vsel %vm134, 1, 0
    %v263 = vsel %vm135, 1, 0
    %v264 = vsel %vm136, 1, 0
    %v265 = vsel %vm137, 1, 0
    %v266 = vsel %vm138, 1, 0
    %v267 = vsel %vm139, 1, 0
    %v268 = vsel %vm140, 1, 0
    %v269 = vsel %vm141, 1, 0
    %v270 = vsel %vm142, 1, 0
    %v271 = vsel %vm143, 1, 0
    %v272 = vsel %vm144, 1, 0
    %v273 = vsel %vm145, 1, 0
    %v274 = vsel %vm146, 1, 0
    %v275 = vsel %vm147, 1, 0
    %v276 = vsel %vm148, 1, 0
    %v277 = vsel %vm149, 1, 0
    %v278 = vsel %vm150, 1, 0
    %v279 = vsel %vm151, 1, 0
    %v280 = vsel %vm152, 1, 0
    %v281 = vsel %vm153, 1, 0
    %v282 = vsel %vm154, 1, 0
    %v283 = vsel %vm155, 1, 0
    %v284 = vsel %vm156, 1, 0
    %v285 = vsel %vm157, 1, 0
    %v286 = vsel %vm158, 1, 0
    %v287 = vsel %vm159, 1, 0
    %v288 = vsel %vm160, 1, 0
    %v289 = vsel %vm161, 1, 0
    %v290 = vsel %vm162, 1, 0
    %v291 = vsel %vm163, 1, 0
    %v292 = vsel %vm164, 1, 0
    %v293 = vsel %vm165, 1, 0
    %v294 = vsel %vm166, 1, 0
    %v295 = vsel %vm167, 1, 0
    %v296 = vsel %vm168, 1, 0
    %v297 = vsel %vm169, 1, 0
    %v298 = vsel %vm170, 1, 0
    %v299 = vsel %vm171, 1, 0
    %v300 = vsel %vm172, 1, 0
    %v301 = vsel %vm173, 1, 0
    %v302 = vsel %vm174, 1, 0
    %v303 = vsel %vm175, 1, 0
    %v304 = vsel %vm176, 1, 0
    %v305 = vsel %vm177, 1, 0
    %v306 = vsel %vm178, 1, 0
    %v307 = vsel %vm179, 1, 0
    %v308 = vsel %vm180, 1, 0
    %v309 = vsel %vm181, 1, 0
    %v310 = vsel %vm182, 1, 0
    %v311 = vsel %vm183, 1, 0
    %v312 = vsel %vm184, 1, 0
    %v313 = vsel %vm185, 1, 0
    %v314 = vsel %vm186, 1, 0
    %v315 = vsel %vm187, 1, 0
    %v316 = vsel %vm188, 1, 0
    %v317 = vsel %vm189, 1, 0
    %v318 = vsel %vm190, 1, 0
    %v319 = vsel %vm191, 1, 0
    %v320 = vsel %vm192, 1, 0
    %v321 = vsel %vm193, 1, 0
    %v322 = vsel %vm194, 1, 0
    %v323 = vsel %vm195, 1, 0
    %v324 = vsel %vm196, 1, 0
    %v325 = vsel %vm197, 1, 0
    %v326 = vsel %vm198, 1, 0
    %v327 = vsel %vm199, 1, 0
    %v328 = vsel %vm200, 1, 0
    %v329 = vsel %vm201, 1, 0
    %v330 = vsel %vm202, 1, 0
    %v331 = vsel %vm203, 1, 0
    %v332 = vsel %vm204, 1, 0
    %v333 = vsel %vm205, 1, 0
    %v334 = vcvt.s32.f32 %v206
    %v335 = vcvt.s32.f32 %v207
    %v336 = vcvt.s32.f32 %v208
    %v337 = vcvt.s32.f32 %v209
    %v338 = vcvt.s32.f32 %v210
    %v339 = vcvt.s32.f32 %v211
    %v340 = vcvt.s32.f32 %v212
    %v341 = vcvt.s32.f32 %v213
    %v342 = vcvt.s32.f32 %v214
    %v343 = vcvt.s32.f32 %v215
    %v344 = vcvt.s32.f32 %v216
    %v345 = vcvt.s32.f32 %v217
    %v346 = vcvt.s32.f32 %v218
    %v347 = vcvt.s32.f32 %v219
    %v348 = vcvt.s32.f32 %v220
    %v349 = vcvt.s32.f32 %v221
    %v350 = vcvt.s32.f32 %v222
    %v351 = vcvt.s32.f32 %v223
    %v352 = vcvt.s32.f32 %v224
    %v353 = vcvt.s32.f32 %v225
    %v354 = vcvt.s32.f32 %v226
    %v355 = vcvt.s32.f32 %v227
    %v356 = vcvt.s32.f32 %v228
    %v357 = vcvt.s32.f32 %v229
    %v358 = vcvt.s32.f32 %v230
    %v359 = vcvt.s32.f32 %v231
    %v360 = vcvt.s32.f32 %v232
    %v361 = vcvt.s32.f32 %v233
    %v362 = vcvt.s32.f32 %v234
    %v363 = vcvt.s32.f32 %v235
    %v364 = vcvt.s32.f32 %v236
    %v365 = vcvt.s32.f32 %v237
    %v366 = vcvt.s32.f32 %v238
    %v367 = vcvt.s32.f32 %v239
    %v368 = vcvt.s32.f32 %v240
    %v369 = vcvt.s32.f32 %v241
    %v370 = vcvt.s32.f32 %v242
    %v371 = vcvt.s32.f32 %v243
    %v372 = vcvt.s32.f32 %v244
    %v373 = vcvt.s32.f32 %v245
    %v374 = vcvt.s32.f32 %v246
    %v375 = vcvt.s32.f32 %v247
    %v376 = vcvt.s32.f32 %v248
    %v377 = vcvt.s32.f32 %v249
    %v378 = vcvt.s32.f32 %v250
    %v379 = vcvt.s32.f32 %v251
    %v380 = vcvt.s32.f32 %v252
    %v381 = vcvt.s32.f32 %v253
    %v382 = vcvt.s32.f32 %v254
    %v383 = vcvt.s32.f32 %v255
    %v384 = vcvt.s32.f32 %v256
    %v385 = vcvt.s32.f32 %v257
    %v386 = vcvt.s32.f32 %v258
    %v387 = vcvt.s32.f32 %v259
    %v388 = vcvt.s32.f32 %v260
    %v389 = vcvt.s32.f32 %v261
    %v390 = vcvt.s32.f32 %v262
    %v391 = vcvt.s32.f32 %v263
    %v392 = vcvt.s32.f32 %v264
    %v393 = vcvt.s32.f32 %v265
    %v394 = vcvt.s32.f32 %v266
    %v395 = vcvt.s32.f32 %v267
    %v396 = vcvt.s32.f32 %v268
    %v397 = vcvt.s32.f32 %v269
    %v398 = vcvt.s32.f32 %v270
    %v399 = vcvt.s32.f32 %v271
    %v400 = vcvt.s32.f32 %v272
    %v401 = vcvt.s32.f32 %v273
    %v402 = vcvt.s32.f32 %v274
    %v403 = vcvt.s32.f32 %v275
    %v404 = vcvt.s32.f32 %v276
    %v405 = vcvt.s32.f32 %v277
    %v406 = vcvt.s32.f32 %v278
    %v407 = vcvt.s32.f32 %v279
    %v408 = vcvt.s32.f32 %v280
    %v409 = vcvt.s32.f32 %v281
    %v410 = vcvt.s32.f32 %v282
    %v411 = vcvt.s32.f32 %v283
    %v412 = vcvt.s32.f32 %v284
    %v413 = vcvt.s32.f32 %v285
    %v414 = vcvt.s32.f32 %v286
    %v415 = vcvt.s32.f32 %v287
    %v416 = vcvt.s32.f32 %v288
    %v417 = vcvt.s32.f32 %v289
    %v418 = vcvt.s32.f32 %v290
    %v419 = vcvt.s32.f32 %v291
    %v420 = vcvt.s32.f32 %v292
    %v421 = vcvt.s32.f32 %v293
    %v422 = vcvt.s32.f32 %v294
    %v423 = vcvt.s32.f32 %v295
    %v424 = vcvt.s32.f32 %v296
    %v425 = vcvt.s32.f32 %v297
    %v426 = vcvt.s32.f32 %v298
    %v427 = vcvt.s32.f32 %v299
    %v428 = vcvt.s32.f32 %v300
    %v429 = vcvt.s32.f32 %v301
    %v430 = vcvt.s32.f32 %v302
    %v431 = vcvt.s32.f32 %v303
    %v432 = vcvt.s32.f32 %v304
    %v433 = vcvt.s32.f32 %v305
    %v434 = vcvt.s32.f32 %v306
    %v435 = vcvt.s32.f32 %v307
    %v436 = vcvt.s32.f32 %v308
    %v437 = vcvt.s32.f32 %v309
    %v438 = vcvt.s32.f32 %v310
    %v439 = vcvt.s32.f32 %v311
    %v440 = vcvt.s32.f32 %v312
    %v441 = vcvt.s32.f32 %v313
    %v442 = vcvt.s32.f32 %v314
    %v443 = vcvt.s32.f32 %v315
    %v444 = vcvt.s32.f32 %v316
    %v445 = vcvt.s32.f32 %v317
    %v446 = vcvt.s32.f32 %v318
    %v447 = vcvt.s32.f32 %v319
    %v448 = vcvt.s32.f32 %v320
    %v449 = vcvt.s32.f32 %v321
    %v450 = vcvt.s32.f32 %v322
    %v451 = vcvt.s32.f32 %v323
    %v452 = vcvt.s32.f32 %v324
    %v453 = vcvt.s32.f32 %v325
    %v454 = vcvt.s32.f32 %v326
    %v455 = vcvt.s32.f32 %v327
    %v456 = vcvt.s32.f32 %v328
    %v457 = vcvt.s32.f32 %v329
    %v458 = vcvt.s32.f32 %v330
    %v459 = vcvt.s32.f32 %v331
    %v460 = vcvt.s32.f32 %v332
    %v461 = vcvt.s32.f32 %v333
    %v462 = vld [vmem:[#allocation2] sm:$0xff]
    %v463 = vld [vmem:[#allocation2 + $0x8] sm:$0xff]
    %464 = vmatpush.msra.mxu0 %v394
    %465 = vmatpush.msra.mxu0 %v390
    %466 = vmatpush.msra.mxu0 %v386
    %467 = vmatpush.msra.mxu0 %v382
    %468 = vmatpush.msra.mxu0 %v378
    %469 = vmatpush.msra.mxu0 %v374
    %470 = vmatpush.msra.mxu0 %v370
    %471 = vmatpush.msra.mxu0 %v366
    %472 = vmatpush.msra.mxu0 %v362
    %473 = vmatpush.msra.mxu0 %v358
    %474 = vmatpush.msra.mxu0 %v354
    %475 = vmatpush.msra.mxu0 %v350
    %476 = vmatpush.msra.mxu0 %v346
    %477 = vmatpush.msra.mxu0 %v342
    %478 = vmatpush.msra.mxu0 %v338
    %479 = vmatpush.msra.mxu0 %v334
    %480 = vmatmul.f32.gmra.mxu0 %v462
    %v481 = vpop.f32.mrf.mxu0
    %v482 = vadd.f32 0.0, %v481
    %483 = vdwg.mxu0
    %484 = vmatpush.msra.mxu0 %v458
    %485 = vmatpush.msra.mxu0 %v454
    %486 = vmatpush.msra.mxu0 %v450
    %487 = vmatpush.msra.mxu0 %v446
    %488 = vmatpush.msra.mxu0 %v442
    %489 = vmatpush.msra.mxu0 %v438
    %490 = vmatpush.msra.mxu0 %v434
    %491 = vmatpush.msra.mxu0 %v430
    %492 = vmatpush.msra.mxu0 %v426
    %493 = vmatpush.msra.mxu0 %v422
    %494 = vmatpush.msra.mxu0 %v418
    %495 = vmatpush.msra.mxu0 %v414
    %496 = vmatpush.msra.mxu0 %v410
    %497 = vmatpush.msra.mxu0 %v406
    %498 = vmatpush.msra.mxu0 %v402
    %499 = vmatpush.msra.mxu0 %v398
    %500 = vmatmul.f32.gmra.mxu0 %v463
    %v501 = vpop.f32.mrf.mxu0
    %v502 = vadd.f32 %v482, %v501
    %503 = vdwg.mxu0
    %504 = vmatpush.msra.mxu0 %v395
    %505 = vmatpush.msra.mxu0 %v391
    %506 = vmatpush.msra.mxu0 %v387
    %507 = vmatpush.msra.mxu0 %v383
    %508 = vmatpush.msra.mxu0 %v379
    %509 = vmatpush.msra.mxu0 %v375
    %510 = vmatpush.msra.mxu0 %v371
    %511 = vmatpush.msra.mxu0 %v367
    %512 = vmatpush.msra.mxu0 %v363
    %513 = vmatpush.msra.mxu0 %v359
    %514 = vmatpush.msra.mxu0 %v355
    %515 = vmatpush.msra.mxu0 %v351
    %516 = vmatpush.msra.mxu0 %v347
    %517 = vmatpush.msra.mxu0 %v343
    %518 = vmatpush.msra.mxu0 %v339
    %519 = vmatpush.msra.mxu0 %v335
    %520 = vmatmul.f32.gmra.mxu0 %v462
    %v521 = vpop.f32.mrf.mxu0
    %v522 = vadd.f32 0.0, %v521
    %523 = vdwg.mxu0
    %524 = vmatpush.msra.mxu0 %v459
    %525 = vmatpush.msra.mxu0 %v455
    %526 = vmatpush.msra.mxu0 %v451
    %527 = vmatpush.msra.mxu0 %v447
    %528 = vmatpush.msra.mxu0 %v443
    %529 = vmatpush.msra.mxu0 %v439
    %530 = vmatpush.msra.mxu0 %v435
    %531 = vmatpush.msra.mxu0 %v431
    %532 = vmatpush.msra.mxu0 %v427
    %533 = vmatpush.msra.mxu0 %v423
    %534 = vmatpush.msra.mxu0 %v419
    %535 = vmatpush.msra.mxu0 %v415
    %536 = vmatpush.msra.mxu0 %v411
    %537 = vmatpush.msra.mxu0 %v407
    %538 = vmatpush.msra.mxu0 %v403
    %539 = vmatpush.msra.mxu0 %v399
    %540 = vmatmul.f32.gmra.mxu0 %v463
    %v541 = vpop.f32.mrf.mxu0
    %v542 = vadd.f32 %v522, %v541
    %543 = vdwg.mxu0
    %544 = vmatpush.msra.mxu0 %v396
    %545 = vmatpush.msra.mxu0 %v392
    %546 = vmatpush.msra.mxu0 %v388
    %547 = vmatpush.msra.mxu0 %v384
    %548 = vmatpush.msra.mxu0 %v380
    %549 = vmatpush.msra.mxu0 %v376
    %550 = vmatpush.msra.mxu0 %v372
    %551 = vmatpush.msra.mxu0 %v368
    %552 = vmatpush.msra.mxu0 %v364
    %553 = vmatpush.msra.mxu0 %v360
    %554 = vmatpush.msra.mxu0 %v356
    %555 = vmatpush.msra.mxu0 %v352
    %556 = vmatpush.msra.mxu0 %v348
    %557 = vmatpush.msra.mxu0 %v344
    %558 = vmatpush.msra.mxu0 %v340
    %559 = vmatpush.msra.mxu0 %v336
    %560 = vmatmul.f32.gmra.mxu0 %v462
    %v561 = vpop.f32.mrf.mxu0
    %v562 = vadd.f32 0.0, %v561
    %563 = vdwg.mxu0
    %564 = vmatpush.msra.mxu0 %v460
    %565 = vmatpush.msra.mxu0 %v456
    %566 = vmatpush.msra.mxu0 %v452
    %567 = vmatpush.msra.mxu0 %v448
    %568 = vmatpush.msra.mxu0 %v444
    %569 = vmatpush.msra.mxu0 %v440
    %570 = vmatpush.msra.mxu0 %v436
    %571 = vmatpush.msra.mxu0 %v432
    %572 = vmatpush.msra.mxu0 %v428
    %573 = vmatpush.msra.mxu0 %v424
    %574 = vmatpush.msra.mxu0 %v420
    %575 = vmatpush.msra.mxu0 %v416
    %576 = vmatpush.msra.mxu0 %v412
    %577 = vmatpush.msra.mxu0 %v408
    %578 = vmatpush.msra.mxu0 %v404
    %579 = vmatpush.msra.mxu0 %v400
    %580 = vmatmul.f32.gmra.mxu0 %v463
    %v581 = vpop.f32.mrf.mxu0
    %v582 = vadd.f32 %v562, %v581
    %583 = vdwg.mxu0
    %584 = vmatpush.msra.mxu0 %v397
    %585 = vmatpush.msra.mxu0 %v393
    %586 = vmatpush.msra.mxu0 %v389
    %587 = vmatpush.msra.mxu0 %v385
    %588 = vmatpush.msra.mxu0 %v381
    %589 = vmatpush.msra.mxu0 %v377
    %590 = vmatpush.msra.mxu0 %v373
    %591 = vmatpush.msra.mxu0 %v369
    %592 = vmatpush.msra.mxu0 %v365
    %593 = vmatpush.msra.mxu0 %v361
    %594 = vmatpush.msra.mxu0 %v357
    %595 = vmatpush.msra.mxu0 %v353
    %596 = vmatpush.msra.mxu0 %v349
    %597 = vmatpush.msra.mxu0 %v345
    %598 = vmatpush.msra.mxu0 %v341
    %599 = vmatpush.msra.mxu0 %v337
    %600 = vmatmul.f32.gmra.mxu0 %v462
    %v601 = vpop.f32.mrf.mxu0
    %v602 = vadd.f32 0.0, %v601
    %603 = vdwg.mxu0
    %604 = vmatpush.msra.mxu0 %v461
    %605 = vmatpush.msra.mxu0 %v457
    %606 = vmatpush.msra.mxu0 %v453
    %607 = vmatpush.msra.mxu0 %v449
    %608 = vmatpush.msra.mxu0 %v445
    %609 = vmatpush.msra.mxu0 %v441
    %610 = vmatpush.msra.mxu0 %v437
    %611 = vmatpush.msra.mxu0 %v433
    %612 = vmatpush.msra.mxu0 %v429
    %613 = vmatpush.msra.mxu0 %v425
    %614 = vmatpush.msra.mxu0 %v421
    %615 = vmatpush.msra.mxu0 %v417
    %616 = vmatpush.msra.mxu0 %v413
    %617 = vmatpush.msra.mxu0 %v409
    %618 = vmatpush.msra.mxu0 %v405
    %619 = vmatpush.msra.mxu0 %v401
    %620 = vmatmul.f32.gmra.mxu0 %v463
    %v621 = vpop.f32.mrf.mxu0
    %v622 = vadd.f32 %v602, %v621
    %623 = vdwg.mxu0
    %625 = vrot.lane.b32.xlu0 %v502, 32
    %v626 = vpop.permute.xlu0 %625
    %628 = vrot.lane.b32.xlu0 %v502, 64
    %v629 = vpop.permute.xlu0 %628
    %631 = vrot.lane.b32.xlu0 %v502, 96
    %v632 = vpop.permute.xlu0 %631
    %635 = vrot.lane.b32.xlu0 %v542, 32
    %v636 = vpop.permute.xlu0 %635
    %638 = vrot.lane.b32.xlu0 %v542, 64
    %v639 = vpop.permute.xlu0 %638
    %641 = vrot.lane.b32.xlu0 %v542, 96
    %v642 = vpop.permute.xlu0 %641
    %vm644 = vcmask 261120
    %v645 = vsel %vm644, %v502, %v626
    %vm646 = vcmask 523264
    %v647 = vsel %vm646, %v645, %v626
    %vm648 = vcmask 785408
    %v649 = vsel %vm648, %v647, %v629
    %v650 = vsel %vm644, %v629, %v632
    %v651 = vsel %vm646, %v650, %v632
    %v652 = vsel %vm648, %v651, %v502
    %v653 = vsel %vm644, %v542, %v636
    %v654 = vsel %vm646, %v653, %v636
    %v655 = vsel %vm648, %v654, %v639
    %v656 = vsel %vm644, %v639, %v642
    %v657 = vsel %vm646, %v656, %v642
    %v658 = vsel %vm648, %v657, %v542
    %660 = vrot.lane.b32.xlu0 %v582, 32
    %v661 = vpop.permute.xlu0 %660
    %663 = vrot.lane.b32.xlu0 %v582, 64
    %v664 = vpop.permute.xlu0 %663
    %666 = vrot.lane.b32.xlu0 %v582, 96
    %v667 = vpop.permute.xlu0 %666
    %670 = vrot.lane.b32.xlu0 %v622, 32
    %v671 = vpop.permute.xlu0 %670
    %673 = vrot.lane.b32.xlu0 %v622, 64
    %v674 = vpop.permute.xlu0 %673
    %676 = vrot.lane.b32.xlu0 %v622, 96
    %v677 = vpop.permute.xlu0 %676
    %v679 = vsel %vm644, %v582, %v661
    %v680 = vsel %vm646, %v679, %v661
    %v681 = vsel %vm648, %v680, %v664
    %v682 = vsel %vm644, %v664, %v667
    %v683 = vsel %vm646, %v682, %v667
    %v684 = vsel %vm648, %v683, %v582
    %v685 = vsel %vm644, %v622, %v671
    %v686 = vsel %vm646, %v685, %v671
    %v687 = vsel %vm648, %v686, %v674
    %v688 = vsel %vm644, %v674, %v677
    %v689 = vsel %vm646, %v688, %v677
    %v690 = vsel %vm648, %v689, %v622
    %691 = vst [vmem:[#allocation7] sm:$0xff] %v649
    %692 = vst [vmem:[#allocation7 + $0x8] sm:$0xff] %v652
    %693 = vst [vmem:[#allocation7 + $0x10] sm:$0xff] %v655
    %694 = vst [vmem:[#allocation7 + $0x18] sm:$0xff] %v658
    %695 = vst [vmem:[#allocation7 + $0x20] sm:$0xff] %v681
    %696 = vst [vmem:[#allocation7 + $0x28] sm:$0xff] %v684
    %697 = vst [vmem:[#allocation7 + $0x30] sm:$0xff] %v687
    %698 = vst [vmem:[#allocation7 + $0x38] sm:$0xff] %v690
    // Predicated region
    $region18: #{tpu_custom_call.1} parent=1 // pred_check
      _
    $region19: #{tpu_custom_call.1} parent=1 // pred_check_branch
      %700 = sbr.rel (0) target = $region21
    $region20: #{tpu_custom_call.1} parent=1 // pred_region
      %702 = vsyncadd [#allocation4], 0
      %s704 = sshll.u32 [#allocation7], 4
      %s705 = int_to_ptr.vmem [resolvable:$true] %s704
      %s706 = sshll.u32 %s2, 4
      %s707 = int_to_ptr.hbm [resolvable:$true] %s706
      %709 = dma.vmem_to_hbm [thread:$0]  %s705, 1024, %s707, [#allocation4]
    $region21: #{tpu_custom_call.1} parent=1 // pred_fallthru
      _
    // Predicated region
    $region22: #{tpu_custom_call.1} parent=1 // pred_check
      _
    $region23: #{tpu_custom_call.1} parent=1 // pred_check_branch
      %711 = sbr.rel (0) target = $region25
    $region24: #{tpu_custom_call.1} parent=1 // pred_region
      %713 = dma.done [#allocation4], 1024
    $region25: #{tpu_custom_call.1} parent=1 // pred_fallthru
      _
    %714 = vsyncpa [#allocation3], 1
    %715 = vsyncpa [#allocation6], 1
    %716 = vsyncpa [#allocation4], 1

// kernel: tpu_custom_call.1
$region0: #{tpu_custom_call.1}
  #allocation0 [shape = 'u32[]', space=smem, size = 0x4, offset = 0x4, fixed_abs, tag = 'smem constant byte address 0x4 - core index']
  #allocation1 [shape = 'u32[72,128]{1,0:T(1,128)}', space=vmem, size = 0x9000, scoped, tag = 'internal scratch']
  %s0 = inlined_call_operand.hbm [shape: f32[8,256], index: 0, kind: input, shape index: {}]
  %s1 = inlined_call_operand.hbm [shape: s32[1,1024], index: 1, kind: input, shape index: {}]
  %s2 = inlined_call_operand.hbm [shape: f32[8,1024], index: 2, kind: output, shape index: {}]
  %s3 = sld [smem:[#allocation0]]
  $region26: #{tpu_custom_call.1} parent=0
    _
  %s5 = ssub.s32 1, %s3
  %s6 = scalar_select 0, %s5, %s3
  $region1: #{tpu_custom_call.1} parent=0
    #allocation2 [shape = 'u8[8192]{0}', space=vmem, size = 0x2000, scoped, tag = 'input window, operand 0, single buffered']
    #allocation3 [shape = 's32[1]{0}', space=sflag, size = 0x4, scoped, tag = 'scoped memory for tpu_custom_call.1']
    #allocation4 [shape = 's32[1]{0}', space=sflag, size = 0x4, scoped, tag = 'scoped memory for tpu_custom_call.1']
    #allocation5 [shape = 'u8[4096]{0}', space=vmem, size = 0x1000, scoped, tag = 'input window, operand 1, single buffered']
    #allocation6 [shape = 's32[1]{0}', space=sflag, size = 0x4, scoped, tag = 'scoped memory for tpu_custom_call.1']
    #allocation7 [shape = 'u8[32768]{0}', space=vmem, size = 0x8000, scoped, tag = 'output window, operand 0, single buffered']
    %7 = vsyncpa [#allocation3], 0
    %8 = vsyncpa [#allocation6], 0
    %9 = vsyncpa [#allocation4], 0
    // Predicated region
    $region2: #{tpu_custom_call.1} parent=1 // pred_check
      _
    $region3: #{tpu_custom_call.1} parent=1 // pred_check_branch
      %11 = sbr.rel (0) target = $region5
    $region4: #{tpu_custom_call.1} parent=1 // pred_region
      %13 = vsyncadd [#allocation3], 0
      %s15 = sshll.u32 %s0, 4
      %s16 = int_to_ptr.hbm [resolvable:$true] %s15
      %s17 = sshll.u32 [#allocation2], 4
      %s18 = int_to_ptr.vmem [resolvable:$true] %s17
      %20 = dma.hbm_to_vmem [thread:$0]  %s16, 256, %s18, [#allocation3]
    $region5: #{tpu_custom_call.1} parent=1 // pred_fallthru
      _
    // Predicated region
    $region6: #{tpu_custom_call.1} parent=1 // pred_check
      _
    $region7: #{tpu_custom_call.1} parent=1 // pred_check_branch
      %22 = sbr.rel (0) target = $region9
    $region8: #{tpu_custom_call.1} parent=1 // pred_region
      %24 = vsyncadd [#allocation6], 0
      %s26 = sshll.u32 %s1, 4
      %s27 = int_to_ptr.hbm [resolvable:$true] %s26
      %s28 = sshll.u32 [#allocation5], 4
      %s29 = int_to_ptr.vmem [resolvable:$true] %s28
      %31 = dma.hbm_to_vmem [thread:$0]  %s27, 128, %s29, [#allocation6]
    $region9: #{tpu_custom_call.1} parent=1 // pred_fallthru
      _
    // Predicated region
    $region10: #{tpu_custom_call.1} parent=1 // pred_check
      _
    $region11: #{tpu_custom_call.1} parent=1 // pred_check_branch
      %33 = sbr.rel (0) target = $region13
    $region12: #{tpu_custom_call.1} parent=1 // pred_region
      %35 = dma.done [#allocation3], 256
    $region13: #{tpu_custom_call.1} parent=1 // pred_fallthru
      _
    // Predicated region
    $region14: #{tpu_custom_call.1} parent=1 // pred_check
      _
    $region15: #{tpu_custom_call.1} parent=1 // pred_check_branch
      %37 = sbr.rel (0) target = $region17
    $region16: #{tpu_custom_call.1} parent=1 // pred_region
      %39 = dma.done [#allocation6], 128
    $region17: #{tpu_custom_call.1} parent=1 // pred_fallthru
      _
    %v40 = vlaneseq
    %v41 = vshrl.u32 %v40, 7
    %v42 = vadd.s32 %v41, 8
    %v43 = vadd.s32 %v41, 16
    %v44 = vadd.s32 %v41, 24
    %v45 = vadd.s32 %v41, 32
    %v46 = vadd.s32 %v41, 40
    %v47 = vadd.s32 %v41, 48
    %v48 = vadd.s32 %v41, 56
    %v49 = vadd.s32 %v41, 64
    %v50 = vadd.s32 %v41, 72
    %v51 = vadd.s32 %v41, 80
    %v52 = vadd.s32 %v41, 88
    %v53 = vadd.s32 %v41, 96
    %v54 = vadd.s32 %v41, 104
    %v55 = vadd.s32 %v41, 112
    %v56 = vadd.s32 %v41, 120
    %v57 = vadd.s32 %v41, 128
    %v58 = vadd.s32 %v41, 136
    %v59 = vadd.s32 %v41, 144
    %v60 = vadd.s32 %v41, 152
    %v61 = vadd.s32 %v41, 160
    %v62 = vadd.s32 %v41, 168
    %v63 = vadd.s32 %v41, 176
    %v64 = vadd.s32 %v41, 184
    %v65 = vadd.s32 %v41, 192
    %v66 = vadd.s32 %v41, 200
    %v67 = vadd.s32 %v41, 208
    %v68 = vadd.s32 %v41, 216
    %v69 = vadd.s32 %v41, 224
    %v70 = vadd.s32 %v41, 232
    %v71 = vadd.s32 %v41, 240
    %v72 = vadd.s32 %v41, 248
    %v73 = vld [vmem:[#allocation5] sm:$0xff]
    %v74 = vperm.slane %v73, 0
    %v75 = vperm.slane %v73, 1
    %v76 = vperm.slane %v73, 2
    %v77 = vperm.slane %v73, 3
    %v78 = vperm.slane %v73, 4
    %v79 = vperm.slane %v73, 5
    %v80 = vperm.slane %v73, 6
    %v81 = vperm.slane %v73, 7
    %vm82 = vcmp.eq.s32.totalorder %v41, %v74
    %vm83 = vcmp.eq.s32.totalorder %v41, %v75
    %vm84 = vcmp.eq.s32.totalorder %v41, %v76
    %vm85 = vcmp.eq.s32.totalorder %v41, %v77
    %vm86 = vcmp.eq.s32.totalorder %v41, %v78
    %vm87 = vcmp.eq.s32.totalorder %v41, %v79
    %vm88 = vcmp.eq.s32.totalorder %v41, %v80
    %vm89 = vcmp.eq.s32.totalorder %v41, %v81
    %vm90 = vcmp.eq.s32.totalorder %v42, %v74
    %vm91 = vcmp.eq.s32.totalorder %v42, %v75
    %vm92 = vcmp.eq.s32.totalorder %v42, %v76
    %vm93 = vcmp.eq.s32.totalorder %v42, %v77
    %vm94 = vcmp.eq.s32.totalorder %v42, %v78
    %vm95 = vcmp.eq.s32.totalorder %v42, %v79
    %vm96 = vcmp.eq.s32.totalorder %v42, %v80
    %vm97 = vcmp.eq.s32.totalorder %v42, %v81
    %vm98 = vcmp.eq.s32.totalorder %v43, %v74
    %vm99 = vcmp.eq.s32.totalorder %v43, %v75
    %vm100 = vcmp.eq.s32.totalorder %v43, %v76
    %vm101 = vcmp.eq.s32.totalorder %v43, %v77
    %vm102 = vcmp.eq.s32.totalorder %v43, %v78
    %vm103 = vcmp.eq.s32.totalorder %v43, %v79
    %vm104 = vcmp.eq.s32.totalorder %v43, %v80
    %vm105 = vcmp.eq.s32.totalorder %v43, %v81
    %vm106 = vcmp.eq.s32.totalorder %v44, %v74
    %vm107 = vcmp.eq.s32.totalorder %v44, %v75
    %vm108 = vcmp.eq.s32.totalorder %v44, %v76
    %vm109 = vcmp.eq.s32.totalorder %v44, %v77
    %vm110 = vcmp.eq.s32.totalorder %v44, %v78
    %vm111 = vcmp.eq.s32.totalorder %v44, %v79
    %vm112 = vcmp.eq.s32.totalorder %v44, %v80
    %vm113 = vcmp.eq.s32.totalorder %v44, %v81
    %vm114 = vcmp.eq.s32.totalorder %v45, %v74
    %vm115 = vcmp.eq.s32.totalorder %v45, %v75
    %vm116 = vcmp.eq.s32.totalorder %v45, %v76
    %vm117 = vcmp.eq.s32.totalorder %v45, %v77
    %vm118 = vcmp.eq.s32.totalorder %v45, %v78
    %vm119 = vcmp.eq.s32.totalorder %v45, %v79
    %vm120 = vcmp.eq.s32.totalorder %v45, %v80
    %vm121 = vcmp.eq.s32.totalorder %v45, %v81
    %vm122 = vcmp.eq.s32.totalorder %v46, %v74
    %vm123 = vcmp.eq.s32.totalorder %v46, %v75
    %vm124 = vcmp.eq.s32.totalorder %v46, %v76
    %vm125 = vcmp.eq.s32.totalorder %v46, %v77
    %vm126 = vcmp.eq.s32.totalorder %v46, %v78
    %vm127 = vcmp.eq.s32.totalorder %v46, %v79
    %vm128 = vcmp.eq.s32.totalorder %v46, %v80
    %vm129 = vcmp.eq.s32.totalorder %v46, %v81
    %vm130 = vcmp.eq.s32.totalorder %v47, %v74
    %vm131 = vcmp.eq.s32.totalorder %v47, %v75
    %vm132 = vcmp.eq.s32.totalorder %v47, %v76
    %vm133 = vcmp.eq.s32.totalorder %v47, %v77
    %vm134 = vcmp.eq.s32.totalorder %v47, %v78
    %vm135 = vcmp.eq.s32.totalorder %v47, %v79
    %vm136 = vcmp.eq.s32.totalorder %v47, %v80
    %vm137 = vcmp.eq.s32.totalorder %v47, %v81
    %vm138 = vcmp.eq.s32.totalorder %v48, %v74
    %vm139 = vcmp.eq.s32.totalorder %v48, %v75
    %vm140 = vcmp.eq.s32.totalorder %v48, %v76
    %vm141 = vcmp.eq.s32.totalorder %v48, %v77
    %vm142 = vcmp.eq.s32.totalorder %v48, %v78
    %vm143 = vcmp.eq.s32.totalorder %v48, %v79
    %vm144 = vcmp.eq.s32.totalorder %v48, %v80
    %vm145 = vcmp.eq.s32.totalorder %v48, %v81
    %vm146 = vcmp.eq.s32.totalorder %v49, %v74
    %vm147 = vcmp.eq.s32.totalorder %v49, %v75
    %vm148 = vcmp.eq.s32.totalorder %v49, %v76
    %vm149 = vcmp.eq.s32.totalorder %v49, %v77
    %vm150 = vcmp.eq.s32.totalorder %v49, %v78
    %vm151 = vcmp.eq.s32.totalorder %v49, %v79
    %vm152 = vcmp.eq.s32.totalorder %v49, %v80
    %vm153 = vcmp.eq.s32.totalorder %v49, %v81
    %vm154 = vcmp.eq.s32.totalorder %v50, %v74
    %vm155 = vcmp.eq.s32.totalorder %v50, %v75
    %vm156 = vcmp.eq.s32.totalorder %v50, %v76
    %vm157 = vcmp.eq.s32.totalorder %v50, %v77
    %vm158 = vcmp.eq.s32.totalorder %v50, %v78
    %vm159 = vcmp.eq.s32.totalorder %v50, %v79
    %vm160 = vcmp.eq.s32.totalorder %v50, %v80
    %vm161 = vcmp.eq.s32.totalorder %v50, %v81
    %vm162 = vcmp.eq.s32.totalorder %v51, %v74
    %vm163 = vcmp.eq.s32.totalorder %v51, %v75
    %vm164 = vcmp.eq.s32.totalorder %v51, %v76
    %vm165 = vcmp.eq.s32.totalorder %v51, %v77
    %vm166 = vcmp.eq.s32.totalorder %v51, %v78
    %vm167 = vcmp.eq.s32.totalorder %v51, %v79
    %vm168 = vcmp.eq.s32.totalorder %v51, %v80
    %vm169 = vcmp.eq.s32.totalorder %v51, %v81
    %vm170 = vcmp.eq.s32.totalorder %v52, %v74
    %vm171 = vcmp.eq.s32.totalorder %v52, %v75
    %vm172 = vcmp.eq.s32.totalorder %v52, %v76
    %vm173 = vcmp.eq.s32.totalorder %v52, %v77
    %vm174 = vcmp.eq.s32.totalorder %v52, %v78
    %vm175 = vcmp.eq.s32.totalorder %v52, %v79
    %vm176 = vcmp.eq.s32.totalorder %v52, %v80
    %vm177 = vcmp.eq.s32.totalorder %v52, %v81
    %vm178 = vcmp.eq.s32.totalorder %v53, %v74
    %vm179 = vcmp.eq.s32.totalorder %v53, %v75
    %vm180 = vcmp.eq.s32.totalorder %v53, %v76
    %vm181 = vcmp.eq.s32.totalorder %v53, %v77
    %vm182 = vcmp.eq.s32.totalorder %v53, %v78
    %vm183 = vcmp.eq.s32.totalorder %v53, %v79
    %vm184 = vcmp.eq.s32.totalorder %v53, %v80
    %vm185 = vcmp.eq.s32.totalorder %v53, %v81
    %vm186 = vcmp.eq.s32.totalorder %v54, %v74
    %vm187 = vcmp.eq.s32.totalorder %v54, %v75
    %vm188 = vcmp.eq.s32.totalorder %v54, %v76
    %vm189 = vcmp.eq.s32.totalorder %v54, %v77
    %vm190 = vcmp.eq.s32.totalorder %v54, %v78
    %vm191 = vcmp.eq.s32.totalorder %v54, %v79
    %vm192 = vcmp.eq.s32.totalorder %v54, %v80
    %vm193 = vcmp.eq.s32.totalorder %v54, %v81
    %vm194 = vcmp.eq.s32.totalorder %v55, %v74
    %vm195 = vcmp.eq.s32.totalorder %v55, %v75
    %vm196 = vcmp.eq.s32.totalorder %v55, %v76
    %vm197 = vcmp.eq.s32.totalorder %v55, %v77
    %vm198 = vcmp.eq.s32.totalorder %v55, %v78
    %vm199 = vcmp.eq.s32.totalorder %v55, %v79
    %vm200 = vcmp.eq.s32.totalorder %v55, %v80
    %vm201 = vcmp.eq.s32.totalorder %v55, %v81
    %vm202 = vcmp.eq.s32.totalorder %v56, %v74
    %vm203 = vcmp.eq.s32.totalorder %v56, %v75
    %vm204 = vcmp.eq.s32.totalorder %v56, %v76
    %vm205 = vcmp.eq.s32.totalorder %v56, %v77
    %vm206 = vcmp.eq.s32.totalorder %v56, %v78
    %vm207 = vcmp.eq.s32.totalorder %v56, %v79
    %vm208 = vcmp.eq.s32.totalorder %v56, %v80
    %vm209 = vcmp.eq.s32.totalorder %v56, %v81
    %vm210 = vcmp.eq.s32.totalorder %v57, %v74
    %vm211 = vcmp.eq.s32.totalorder %v57, %v75
    %vm212 = vcmp.eq.s32.totalorder %v57, %v76
    %vm213 = vcmp.eq.s32.totalorder %v57, %v77
    %vm214 = vcmp.eq.s32.totalorder %v57, %v78
    %vm215 = vcmp.eq.s32.totalorder %v57, %v79
    %vm216 = vcmp.eq.s32.totalorder %v57, %v80
    %vm217 = vcmp.eq.s32.totalorder %v57, %v81
    %vm218 = vcmp.eq.s32.totalorder %v58, %v74
    %vm219 = vcmp.eq.s32.totalorder %v58, %v75
    %vm220 = vcmp.eq.s32.totalorder %v58, %v76
    %vm221 = vcmp.eq.s32.totalorder %v58, %v77
    %vm222 = vcmp.eq.s32.totalorder %v58, %v78
    %vm223 = vcmp.eq.s32.totalorder %v58, %v79
    %vm224 = vcmp.eq.s32.totalorder %v58, %v80
    %vm225 = vcmp.eq.s32.totalorder %v58, %v81
    %vm226 = vcmp.eq.s32.totalorder %v59, %v74
    %vm227 = vcmp.eq.s32.totalorder %v59, %v75
    %vm228 = vcmp.eq.s32.totalorder %v59, %v76
    %vm229 = vcmp.eq.s32.totalorder %v59, %v77
    %vm230 = vcmp.eq.s32.totalorder %v59, %v78
    %vm231 = vcmp.eq.s32.totalorder %v59, %v79
    %vm232 = vcmp.eq.s32.totalorder %v59, %v80
    %vm233 = vcmp.eq.s32.totalorder %v59, %v81
    %vm234 = vcmp.eq.s32.totalorder %v60, %v74
    %vm235 = vcmp.eq.s32.totalorder %v60, %v75
    %vm236 = vcmp.eq.s32.totalorder %v60, %v76
    %vm237 = vcmp.eq.s32.totalorder %v60, %v77
    %vm238 = vcmp.eq.s32.totalorder %v60, %v78
    %vm239 = vcmp.eq.s32.totalorder %v60, %v79
    %vm240 = vcmp.eq.s32.totalorder %v60, %v80
    %vm241 = vcmp.eq.s32.totalorder %v60, %v81
    %vm242 = vcmp.eq.s32.totalorder %v61, %v74
    %vm243 = vcmp.eq.s32.totalorder %v61, %v75
    %vm244 = vcmp.eq.s32.totalorder %v61, %v76
    %vm245 = vcmp.eq.s32.totalorder %v61, %v77
    %vm246 = vcmp.eq.s32.totalorder %v61, %v78
    %vm247 = vcmp.eq.s32.totalorder %v61, %v79
    %vm248 = vcmp.eq.s32.totalorder %v61, %v80
    %vm249 = vcmp.eq.s32.totalorder %v61, %v81
    %vm250 = vcmp.eq.s32.totalorder %v62, %v74
    %vm251 = vcmp.eq.s32.totalorder %v62, %v75
    %vm252 = vcmp.eq.s32.totalorder %v62, %v76
    %vm253 = vcmp.eq.s32.totalorder %v62, %v77
    %vm254 = vcmp.eq.s32.totalorder %v62, %v78
    %vm255 = vcmp.eq.s32.totalorder %v62, %v79
    %vm256 = vcmp.eq.s32.totalorder %v62, %v80
    %vm257 = vcmp.eq.s32.totalorder %v62, %v81
    %vm258 = vcmp.eq.s32.totalorder %v63, %v74
    %vm259 = vcmp.eq.s32.totalorder %v63, %v75
    %vm260 = vcmp.eq.s32.totalorder %v63, %v76
    %vm261 = vcmp.eq.s32.totalorder %v63, %v77
    %vm262 = vcmp.eq.s32.totalorder %v63, %v78
    %vm263 = vcmp.eq.s32.totalorder %v63, %v79
    %vm264 = vcmp.eq.s32.totalorder %v63, %v80
    %vm265 = vcmp.eq.s32.totalorder %v63, %v81
    %vm266 = vcmp.eq.s32.totalorder %v64, %v74
    %vm267 = vcmp.eq.s32.totalorder %v64, %v75
    %vm268 = vcmp.eq.s32.totalorder %v64, %v76
    %vm269 = vcmp.eq.s32.totalorder %v64, %v77
    %vm270 = vcmp.eq.s32.totalorder %v64, %v78
    %vm271 = vcmp.eq.s32.totalorder %v64, %v79
    %vm272 = vcmp.eq.s32.totalorder %v64, %v80
    %vm273 = vcmp.eq.s32.totalorder %v64, %v81
    %vm274 = vcmp.eq.s32.totalorder %v65, %v74
    %vm275 = vcmp.eq.s32.totalorder %v65, %v75
    %vm276 = vcmp.eq.s32.totalorder %v65, %v76
    %vm277 = vcmp.eq.s32.totalorder %v65, %v77
    %vm278 = vcmp.eq.s32.totalorder %v65, %v78
    %vm279 = vcmp.eq.s32.totalorder %v65, %v79
    %vm280 = vcmp.eq.s32.totalorder %v65, %v80
    %vm281 = vcmp.eq.s32.totalorder %v65, %v81
    %vm282 = vcmp.eq.s32.totalorder %v66, %v74
    %vm283 = vcmp.eq.s32.totalorder %v66, %v75
    %vm284 = vcmp.eq.s32.totalorder %v66, %v76
    %vm285 = vcmp.eq.s32.totalorder %v66, %v77
    %vm286 = vcmp.eq.s32.totalorder %v66, %v78
    %vm287 = vcmp.eq.s32.totalorder %v66, %v79
    %vm288 = vcmp.eq.s32.totalorder %v66, %v80
    %vm289 = vcmp.eq.s32.totalorder %v66, %v81
    %vm290 = vcmp.eq.s32.totalorder %v67, %v74
    %vm291 = vcmp.eq.s32.totalorder %v67, %v75
    %vm292 = vcmp.eq.s32.totalorder %v67, %v76
    %vm293 = vcmp.eq.s32.totalorder %v67, %v77
    %vm294 = vcmp.eq.s32.totalorder %v67, %v78
    %vm295 = vcmp.eq.s32.totalorder %v67, %v79
    %vm296 = vcmp.eq.s32.totalorder %v67, %v80
    %vm297 = vcmp.eq.s32.totalorder %v67, %v81
    %vm298 = vcmp.eq.s32.totalorder %v68, %v74
    %vm299 = vcmp.eq.s32.totalorder %v68, %v75
    %vm300 = vcmp.eq.s32.totalorder %v68, %v76
    %vm301 = vcmp.eq.s32.totalorder %v68, %v77
    %vm302 = vcmp.eq.s32.totalorder %v68, %v78
    %vm303 = vcmp.eq.s32.totalorder %v68, %v79
    %vm304 = vcmp.eq.s32.totalorder %v68, %v80
    %vm305 = vcmp.eq.s32.totalorder %v68, %v81
    %vm306 = vcmp.eq.s32.totalorder %v69, %v74
    %vm307 = vcmp.eq.s32.totalorder %v69, %v75
    %vm308 = vcmp.eq.s32.totalorder %v69, %v76
    %vm309 = vcmp.eq.s32.totalorder %v69, %v77
    %vm310 = vcmp.eq.s32.totalorder %v69, %v78
    %vm311 = vcmp.eq.s32.totalorder %v69, %v79
    %vm312 = vcmp.eq.s32.totalorder %v69, %v80
    %vm313 = vcmp.eq.s32.totalorder %v69, %v81
    %vm314 = vcmp.eq.s32.totalorder %v70, %v74
    %vm315 = vcmp.eq.s32.totalorder %v70, %v75
    %vm316 = vcmp.eq.s32.totalorder %v70, %v76
    %vm317 = vcmp.eq.s32.totalorder %v70, %v77
    %vm318 = vcmp.eq.s32.totalorder %v70, %v78
    %vm319 = vcmp.eq.s32.totalorder %v70, %v79
    %vm320 = vcmp.eq.s32.totalorder %v70, %v80
    %vm321 = vcmp.eq.s32.totalorder %v70, %v81
    %vm322 = vcmp.eq.s32.totalorder %v71, %v74
    %vm323 = vcmp.eq.s32.totalorder %v71, %v75
    %vm324 = vcmp.eq.s32.totalorder %v71, %v76
    %vm325 = vcmp.eq.s32.totalorder %v71, %v77
    %vm326 = vcmp.eq.s32.totalorder %v71, %v78
    %vm327 = vcmp.eq.s32.totalorder %v71, %v79
    %vm328 = vcmp.eq.s32.totalorder %v71, %v80
    %vm329 = vcmp.eq.s32.totalorder %v71, %v81
    %vm330 = vcmp.eq.s32.totalorder %v72, %v74
    %vm331 = vcmp.eq.s32.totalorder %v72, %v75
    %vm332 = vcmp.eq.s32.totalorder %v72, %v76
    %vm333 = vcmp.eq.s32.totalorder %v72, %v77
    %vm334 = vcmp.eq.s32.totalorder %v72, %v78
    %vm335 = vcmp.eq.s32.totalorder %v72, %v79
    %vm336 = vcmp.eq.s32.totalorder %v72, %v80
    %vm337 = vcmp.eq.s32.totalorder %v72, %v81
    %v338 = vsel %vm82, 1, 0
    %v339 = vsel %vm83, 1, 0
    %v340 = vsel %vm84, 1, 0
    %v341 = vsel %vm85, 1, 0
    %v342 = vsel %vm86, 1, 0
    %v343 = vsel %vm87, 1, 0
    %v344 = vsel %vm88, 1, 0
    %v345 = vsel %vm89, 1, 0
    %v346 = vsel %vm90, 1, 0
    %v347 = vsel %vm91, 1, 0
    %v348 = vsel %vm92, 1, 0
    %v349 = vsel %vm93, 1, 0
    %v350 = vsel %vm94, 1, 0
    %v351 = vsel %vm95, 1, 0
    %v352 = vsel %vm96, 1, 0
    %v353 = vsel %vm97, 1, 0
    %v354 = vsel %vm98, 1, 0
    %v355 = vsel %vm99, 1, 0
    %v356 = vsel %vm100, 1, 0
    %v357 = vsel %vm101, 1, 0
    %v358 = vsel %vm102, 1, 0
    %v359 = vsel %vm103, 1, 0
    %v360 = vsel %vm104, 1, 0
    %v361 = vsel %vm105, 1, 0
    %v362 = vsel %vm106, 1, 0
    %v363 = vsel %vm107, 1, 0
    %v364 = vsel %vm108, 1, 0
    %v365 = vsel %vm109, 1, 0
    %v366 = vsel %vm110, 1, 0
    %v367 = vsel %vm111, 1, 0
    %v368 = vsel %vm112, 1, 0
    %v369 = vsel %vm113, 1, 0
    %v370 = vsel %vm114, 1, 0
    %v371 = vsel %vm115, 1, 0
    %v372 = vsel %vm116, 1, 0
    %v373 = vsel %vm117, 1, 0
    %v374 = vsel %vm118, 1, 0
    %v375 = vsel %vm119, 1, 0
    %v376 = vsel %vm120, 1, 0
    %v377 = vsel %vm121, 1, 0
    %v378 = vsel %vm122, 1, 0
    %v379 = vsel %vm123, 1, 0
    %v380 = vsel %vm124, 1, 0
    %v381 = vsel %vm125, 1, 0
    %v382 = vsel %vm126, 1, 0
    %v383 = vsel %vm127, 1, 0
    %v384 = vsel %vm128, 1, 0
    %v385 = vsel %vm129, 1, 0
    %v386 = vsel %vm130, 1, 0
    %v387 = vsel %vm131, 1, 0
    %v388 = vsel %vm132, 1, 0
    %v389 = vsel %vm133, 1, 0
    %v390 = vsel %vm134, 1, 0
    %v391 = vsel %vm135, 1, 0
    %v392 = vsel %vm136, 1, 0
    %v393 = vsel %vm137, 1, 0
    %v394 = vsel %vm138, 1, 0
    %v395 = vsel %vm139, 1, 0
    %v396 = vsel %vm140, 1, 0
    %v397 = vsel %vm141, 1, 0
    %v398 = vsel %vm142, 1, 0
    %v399 = vsel %vm143, 1, 0
    %v400 = vsel %vm144, 1, 0
    %v401 = vsel %vm145, 1, 0
    %v402 = vsel %vm146, 1, 0
    %v403 = vsel %vm147, 1, 0
    %v404 = vsel %vm148, 1, 0
    %v405 = vsel %vm149, 1, 0
    %v406 = vsel %vm150, 1, 0
    %v407 = vsel %vm151, 1, 0
    %v408 = vsel %vm152, 1, 0
    %v409 = vsel %vm153, 1, 0
    %v410 = vsel %vm154, 1, 0
    %v411 = vsel %vm155, 1, 0
    %v412 = vsel %vm156, 1, 0
    %v413 = vsel %vm157, 1, 0
    %v414 = vsel %vm158, 1, 0
    %v415 = vsel %vm159, 1, 0
    %v416 = vsel %vm160, 1, 0
    %v417 = vsel %vm161, 1, 0
    %v418 = vsel %vm162, 1, 0
    %v419 = vsel %vm163, 1, 0
    %v420 = vsel %vm164, 1, 0
    %v421 = vsel %vm165, 1, 0
    %v422 = vsel %vm166, 1, 0
    %v423 = vsel %vm167, 1, 0
    %v424 = vsel %vm168, 1, 0
    %v425 = vsel %vm169, 1, 0
    %v426 = vsel %vm170, 1, 0
    %v427 = vsel %vm171, 1, 0
    %v428 = vsel %vm172, 1, 0
    %v429 = vsel %vm173, 1, 0
    %v430 = vsel %vm174, 1, 0
    %v431 = vsel %vm175, 1, 0
    %v432 = vsel %vm176, 1, 0
    %v433 = vsel %vm177, 1, 0
    %v434 = vsel %vm178, 1, 0
    %v435 = vsel %vm179, 1, 0
    %v436 = vsel %vm180, 1, 0
    %v437 = vsel %vm181, 1, 0
    %v438 = vsel %vm182, 1, 0
    %v439 = vsel %vm183, 1, 0
    %v440 = vsel %vm184, 1, 0
    %v441 = vsel %vm185, 1, 0
    %v442 = vsel %vm186, 1, 0
    %v443 = vsel %vm187, 1, 0
    %v444 = vsel %vm188, 1, 0
    %v445 = vsel %vm189, 1, 0
    %v446 = vsel %vm190, 1, 0
    %v447 = vsel %vm191, 1, 0
    %v448 = vsel %vm192, 1, 0
    %v449 = vsel %vm193, 1, 0
    %v450 = vsel %vm194, 1, 0
    %v451 = vsel %vm195, 1, 0
    %v452 = vsel %vm196, 1, 0
    %v453 = vsel %vm197, 1, 0
    %v454 = vsel %vm198, 1, 0
    %v455 = vsel %vm199, 1, 0
    %v456 = vsel %vm200, 1, 0
    %v457 = vsel %vm201, 1, 0
    %v458 = vsel %vm202, 1, 0
    %v459 = vsel %vm203, 1, 0
    %v460 = vsel %vm204, 1, 0
    %v461 = vsel %vm205, 1, 0
    %v462 = vsel %vm206, 1, 0
    %v463 = vsel %vm207, 1, 0
    %v464 = vsel %vm208, 1, 0
    %v465 = vsel %vm209, 1, 0
    %v466 = vsel %vm210, 1, 0
    %v467 = vsel %vm211, 1, 0
    %v468 = vsel %vm212, 1, 0
    %v469 = vsel %vm213, 1, 0
    %v470 = vsel %vm214, 1, 0
    %v471 = vsel %vm215, 1, 0
    %v472 = vsel %vm216, 1, 0
    %v473 = vsel %vm217, 1, 0
    %v474 = vsel %vm218, 1, 0
    %v475 = vsel %vm219, 1, 0
    %v476 = vsel %vm220, 1, 0
    %v477 = vsel %vm221, 1, 0
    %v478 = vsel %vm222, 1, 0
    %v479 = vsel %vm223, 1, 0
    %v480 = vsel %vm224, 1, 0
    %v481 = vsel %vm225, 1, 0
    %v482 = vsel %vm226, 1, 0
    %v483 = vsel %vm227, 1, 0
    %v484 = vsel %vm228, 1, 0
    %v485 = vsel %vm229, 1, 0
    %v486 = vsel %vm230, 1, 0
    %v487 = vsel %vm231, 1, 0
    %v488 = vsel %vm232, 1, 0
    %v489 = vsel %vm233, 1, 0
    %v490 = vsel %vm234, 1, 0
    %v491 = vsel %vm235, 1, 0
    %v492 = vsel %vm236, 1, 0
    %v493 = vsel %vm237, 1, 0
    %v494 = vsel %vm238, 1, 0
    %v495 = vsel %vm239, 1, 0
    %v496 = vsel %vm240, 1, 0
    %v497 = vsel %vm241, 1, 0
    %v498 = vsel %vm242, 1, 0
    %v499 = vsel %vm243, 1, 0
    %v500 = vsel %vm244, 1, 0
    %v501 = vsel %vm245, 1, 0
    %v502 = vsel %vm246, 1, 0
    %v503 = vsel %vm247, 1, 0
    %v504 = vsel %vm248, 1, 0
    %v505 = vsel %vm249, 1, 0
    %v506 = vsel %vm250, 1, 0
    %v507 = vsel %vm251, 1, 0
    %v508 = vsel %vm252, 1, 0
    %v509 = vsel %vm253, 1, 0
    %v510 = vsel %vm254, 1, 0
    %v511 = vsel %vm255, 1, 0
    %v512 = vsel %vm256, 1, 0
    %v513 = vsel %vm257, 1, 0
    %v514 = vsel %vm258, 1, 0
    %v515 = vsel %vm259, 1, 0
    %v516 = vsel %vm260, 1, 0
    %v517 = vsel %vm261, 1, 0
    %v518 = vsel %vm262, 1, 0
    %v519 = vsel %vm263, 1, 0
    %v520 = vsel %vm264, 1, 0
    %v521 = vsel %vm265, 1, 0
    %v522 = vsel %vm266, 1, 0
    %v523 = vsel %vm267, 1, 0
    %v524 = vsel %vm268, 1, 0
    %v525 = vsel %vm269, 1, 0
    %v526 = vsel %vm270, 1, 0
    %v527 = vsel %vm271, 1, 0
    %v528 = vsel %vm272, 1, 0
    %v529 = vsel %vm273, 1, 0
    %v530 = vsel %vm274, 1, 0
    %v531 = vsel %vm275, 1, 0
    %v532 = vsel %vm276, 1, 0
    %v533 = vsel %vm277, 1, 0
    %v534 = vsel %vm278, 1, 0
    %v535 = vsel %vm279, 1, 0
    %v536 = vsel %vm280, 1, 0
    %v537 = vsel %vm281, 1, 0
    %v538 = vsel %vm282, 1, 0
    %v539 = vsel %vm283, 1, 0
    %v540 = vsel %vm284, 1, 0
    %v541 = vsel %vm285, 1, 0
    %v542 = vsel %vm286, 1, 0
    %v543 = vsel %vm287, 1, 0
    %v544 = vsel %vm288, 1, 0
    %v545 = vsel %vm289, 1, 0
    %v546 = vsel %vm290, 1, 0
    %v547 = vsel %vm291, 1, 0
    %v548 = vsel %vm292, 1, 0
    %v549 = vsel %vm293, 1, 0
    %v550 = vsel %vm294, 1, 0
    %v551 = vsel %vm295, 1, 0
    %v552 = vsel %vm296, 1, 0
    %v553 = vsel %vm297, 1, 0
    %v554 = vsel %vm298, 1, 0
    %v555 = vsel %vm299, 1, 0
    %v556 = vsel %vm300, 1, 0
    %v557 = vsel %vm301, 1, 0
    %v558 = vsel %vm302, 1, 0
    %v559 = vsel %vm303, 1, 0
    %v560 = vsel %vm304, 1, 0
    %v561 = vsel %vm305, 1, 0
    %v562 = vsel %vm306, 1, 0
    %v563 = vsel %vm307, 1, 0
    %v564 = vsel %vm308, 1, 0
    %v565 = vsel %vm309, 1, 0
    %v566 = vsel %vm310, 1, 0
    %v567 = vsel %vm311, 1, 0
    %v568 = vsel %vm312, 1, 0
    %v569 = vsel %vm313, 1, 0
    %v570 = vsel %vm314, 1, 0
    %v571 = vsel %vm315, 1, 0
    %v572 = vsel %vm316, 1, 0
    %v573 = vsel %vm317, 1, 0
    %v574 = vsel %vm318, 1, 0
    %v575 = vsel %vm319, 1, 0
    %v576 = vsel %vm320, 1, 0
    %v577 = vsel %vm321, 1, 0
    %v578 = vsel %vm322, 1, 0
    %v579 = vsel %vm323, 1, 0
    %v580 = vsel %vm324, 1, 0
    %v581 = vsel %vm325, 1, 0
    %v582 = vsel %vm326, 1, 0
    %v583 = vsel %vm327, 1, 0
    %v584 = vsel %vm328, 1, 0
    %v585 = vsel %vm329, 1, 0
    %v586 = vsel %vm330, 1, 0
    %v587 = vsel %vm331, 1, 0
    %v588 = vsel %vm332, 1, 0
    %v589 = vsel %vm333, 1, 0
    %v590 = vsel %vm334, 1, 0
    %v591 = vsel %vm335, 1, 0
    %v592 = vsel %vm336, 1, 0
    %v593 = vsel %vm337, 1, 0
    %v594 = vcvt.s32.f32 %v338
    %v595 = vcvt.s32.f32 %v339
    %v596 = vcvt.s32.f32 %v340
    %v597 = vcvt.s32.f32 %v341
    %v598 = vcvt.s32.f32 %v342
    %v599 = vcvt.s32.f32 %v343
    %v600 = vcvt.s32.f32 %v344
    %v601 = vcvt.s32.f32 %v345
    %v602 = vcvt.s32.f32 %v346
    %v603 = vcvt.s32.f32 %v347
    %v604 = vcvt.s32.f32 %v348
    %v605 = vcvt.s32.f32 %v349
    %v606 = vcvt.s32.f32 %v350
    %v607 = vcvt.s32.f32 %v351
    %v608 = vcvt.s32.f32 %v352
    %v609 = vcvt.s32.f32 %v353
    %v610 = vcvt.s32.f32 %v354
    %v611 = vcvt.s32.f32 %v355
    %v612 = vcvt.s32.f32 %v356
    %v613 = vcvt.s32.f32 %v357
    %v614 = vcvt.s32.f32 %v358
    %v615 = vcvt.s32.f32 %v359
    %v616 = vcvt.s32.f32 %v360
    %v617 = vcvt.s32.f32 %v361
    %v618 = vcvt.s32.f32 %v362
    %v619 = vcvt.s32.f32 %v363
    %v620 = vcvt.s32.f32 %v364
    %v621 = vcvt.s32.f32 %v365
    %v622 = vcvt.s32.f32 %v366
    %v623 = vcvt.s32.f32 %v367
    %v624 = vcvt.s32.f32 %v368
    %v625 = vcvt.s32.f32 %v369
    %v626 = vcvt.s32.f32 %v370
    %v627 = vcvt.s32.f32 %v371
    %v628 = vcvt.s32.f32 %v372
    %v629 = vcvt.s32.f32 %v373
    %v630 = vcvt.s32.f32 %v374
    %v631 = vcvt.s32.f32 %v375
    %v632 = vcvt.s32.f32 %v376
    %v633 = vcvt.s32.f32 %v377
    %v634 = vcvt.s32.f32 %v378
    %v635 = vcvt.s32.f32 %v379
    %v636 = vcvt.s32.f32 %v380
    %v637 = vcvt.s32.f32 %v381
    %v638 = vcvt.s32.f32 %v382
    %v639 = vcvt.s32.f32 %v383
    %v640 = vcvt.s32.f32 %v384
    %v641 = vcvt.s32.f32 %v385
    %v642 = vcvt.s32.f32 %v386
    %v643 = vcvt.s32.f32 %v387
    %v644 = vcvt.s32.f32 %v388
    %v645 = vcvt.s32.f32 %v389
    %v646 = vcvt.s32.f32 %v390
    %v647 = vcvt.s32.f32 %v391
    %v648 = vcvt.s32.f32 %v392
    %v649 = vcvt.s32.f32 %v393
    %v650 = vcvt.s32.f32 %v394
    %v651 = vcvt.s32.f32 %v395
    %v652 = vcvt.s32.f32 %v396
    %v653 = vcvt.s32.f32 %v397
    %v654 = vcvt.s32.f32 %v398
    %v655 = vcvt.s32.f32 %v399
    %v656 = vcvt.s32.f32 %v400
    %v657 = vcvt.s32.f32 %v401
    %v658 = vcvt.s32.f32 %v402
    %v659 = vcvt.s32.f32 %v403
    %v660 = vcvt.s32.f32 %v404
    %v661 = vcvt.s32.f32 %v405
    %v662 = vcvt.s32.f32 %v406
    %v663 = vcvt.s32.f32 %v407
    %v664 = vcvt.s32.f32 %v408
    %v665 = vcvt.s32.f32 %v409
    %v666 = vcvt.s32.f32 %v410
    %v667 = vcvt.s32.f32 %v411
    %v668 = vcvt.s32.f32 %v412
    %v669 = vcvt.s32.f32 %v413
    %v670 = vcvt.s32.f32 %v414
    %v671 = vcvt.s32.f32 %v415
    %v672 = vcvt.s32.f32 %v416
    %v673 = vcvt.s32.f32 %v417
    %v674 = vcvt.s32.f32 %v418
    %v675 = vcvt.s32.f32 %v419
    %v676 = vcvt.s32.f32 %v420
    %v677 = vcvt.s32.f32 %v421
    %v678 = vcvt.s32.f32 %v422
    %v679 = vcvt.s32.f32 %v423
    %v680 = vcvt.s32.f32 %v424
    %v681 = vcvt.s32.f32 %v425
    %v682 = vcvt.s32.f32 %v426
    %v683 = vcvt.s32.f32 %v427
    %v684 = vcvt.s32.f32 %v428
    %v685 = vcvt.s32.f32 %v429
    %v686 = vcvt.s32.f32 %v430
    %v687 = vcvt.s32.f32 %v431
    %v688 = vcvt.s32.f32 %v432
    %v689 = vcvt.s32.f32 %v433
    %v690 = vcvt.s32.f32 %v434
    %v691 = vcvt.s32.f32 %v435
    %v692 = vcvt.s32.f32 %v436
    %v693 = vcvt.s32.f32 %v437
    %v694 = vcvt.s32.f32 %v438
    %v695 = vcvt.s32.f32 %v439
    %v696 = vcvt.s32.f32 %v440
    %v697 = vcvt.s32.f32 %v441
    %v698 = vcvt.s32.f32 %v442
    %v699 = vcvt.s32.f32 %v443
    %v700 = vcvt.s32.f32 %v444
    %v701 = vcvt.s32.f32 %v445
    %v702 = vcvt.s32.f32 %v446
    %v703 = vcvt.s32.f32 %v447
    %v704 = vcvt.s32.f32 %v448
    %v705 = vcvt.s32.f32 %v449
    %v706 = vcvt.s32.f32 %v450
    %v707 = vcvt.s32.f32 %v451
    %v708 = vcvt.s32.f32 %v452
    %v709 = vcvt.s32.f32 %v453
    %v710 = vcvt.s32.f32 %v454
    %v711 = vcvt.s32.f32 %v455
    %v712 = vcvt.s32.f32 %v456
    %v713 = vcvt.s32.f32 %v457
    %v714 = vcvt.s32.f32 %v458
    %v715 = vcvt.s32.f32 %v459
    %v716 = vcvt.s32.f32 %v460
    %v717 = vcvt.s32.f32 %v461
    %v718 = vcvt.s32.f32 %v462
    %v719 = vcvt.s32.f32 %v463
    %v720 = vcvt.s32.f32 %v464
    %v721 = vcvt.s32.f32 %v465
    %v722 = vcvt.s32.f32 %v466
    %v723 = vcvt.s32.f32 %v467
    %v724 = vcvt.s32.f32 %v468
    %v725 = vcvt.s32.f32 %v469
    %v726 = vcvt.s32.f32 %v470
    %v727 = vcvt.s32.f32 %v471
    %v728 = vcvt.s32.f32 %v472
    %v729 = vcvt.s32.f32 %v473
    %v730 = vcvt.s32.f32 %v474
    %v731 = vcvt.s32.f32 %v475
    %v732 = vcvt.s32.f32 %v476
    %v733 = vcvt.s32.f32 %v477
    %v734 = vcvt.s32.f32 %v478
    %v735 = vcvt.s32.f32 %v479
    %v736 = vcvt.s32.f32 %v480
    %v737 = vcvt.s32.f32 %v481
    %v738 = vcvt.s32.f32 %v482
    %v739 = vcvt.s32.f32 %v483
    %v740 = vcvt.s32.f32 %v484
    %v741 = vcvt.s32.f32 %v485
    %v742 = vcvt.s32.f32 %v486
    %v743 = vcvt.s32.f32 %v487
    %v744 = vcvt.s32.f32 %v488
    %v745 = vcvt.s32.f32 %v489
    %v746 = vcvt.s32.f32 %v490
    %v747 = vcvt.s32.f32 %v491
    %v748 = vcvt.s32.f32 %v492
    %v749 = vcvt.s32.f32 %v493
    %v750 = vcvt.s32.f32 %v494
    %v751 = vcvt.s32.f32 %v495
    %v752 = vcvt.s32.f32 %v496
    %v753 = vcvt.s32.f32 %v497
    %v754 = vcvt.s32.f32 %v498
    %v755 = vcvt.s32.f32 %v499
    %v756 = vcvt.s32.f32 %v500
    %v757 = vcvt.s32.f32 %v501
    %v758 = vcvt.s32.f32 %v502
    %v759 = vcvt.s32.f32 %v503
    %v760 = vcvt.s32.f32 %v504
    %v761 = vcvt.s32.f32 %v505
    %v762 = vcvt.s32.f32 %v506
    %v763 = vcvt.s32.f32 %v507
    %v764 = vcvt.s32.f32 %v508
    %v765 = vcvt.s32.f32 %v509
    %v766 = vcvt.s32.f32 %v510
    %v767 = vcvt.s32.f32 %v511
    %v768 = vcvt.s32.f32 %v512
    %v769 = vcvt.s32.f32 %v513
    %v770 = vcvt.s32.f32 %v514
    %v771 = vcvt.s32.f32 %v515
    %v772 = vcvt.s32.f32 %v516
    %v773 = vcvt.s32.f32 %v517
    %v774 = vcvt.s32.f32 %v518
    %v775 = vcvt.s32.f32 %v519
    %v776 = vcvt.s32.f32 %v520
    %v777 = vcvt.s32.f32 %v521
    %v778 = vcvt.s32.f32 %v522
    %v779 = vcvt.s32.f32 %v523
    %v780 = vcvt.s32.f32 %v524
    %v781 = vcvt.s32.f32 %v525
    %v782 = vcvt.s32.f32 %v526
    %v783 = vcvt.s32.f32 %v527
    %v784 = vcvt.s32.f32 %v528
    %v785 = vcvt.s32.f32 %v529
    %v786 = vcvt.s32.f32 %v530
    %v787 = vcvt.s32.f32 %v531
    %v788 = vcvt.s32.f32 %v532
    %v789 = vcvt.s32.f32 %v533
    %v790 = vcvt.s32.f32 %v534
    %v791 = vcvt.s32.f32 %v535
    %v792 = vcvt.s32.f32 %v536
    %v793 = vcvt.s32.f32 %v537
    %v794 = vcvt.s32.f32 %v538
    %v795 = vcvt.s32.f32 %v539
    %v796 = vcvt.s32.f32 %v540
    %v797 = vcvt.s32.f32 %v541
    %v798 = vcvt.s32.f32 %v542
    %v799 = vcvt.s32.f32 %v543
    %v800 = vcvt.s32.f32 %v544
    %v801 = vcvt.s32.f32 %v545
    %v802 = vcvt.s32.f32 %v546
    %v803 = vcvt.s32.f32 %v547
    %v804 = vcvt.s32.f32 %v548
    %v805 = vcvt.s32.f32 %v549
    %v806 = vcvt.s32.f32 %v550
    %v807 = vcvt.s32.f32 %v551
    %v808 = vcvt.s32.f32 %v552
    %v809 = vcvt.s32.f32 %v553
    %v810 = vcvt.s32.f32 %v554
    %v811 = vcvt.s32.f32 %v555
    %v812 = vcvt.s32.f32 %v556
    %v813 = vcvt.s32.f32 %v557
    %v814 = vcvt.s32.f32 %v558
    %v815 = vcvt.s32.f32 %v559
    %v816 = vcvt.s32.f32 %v560
    %v817 = vcvt.s32.f32 %v561
    %v818 = vcvt.s32.f32 %v562
    %v819 = vcvt.s32.f32 %v563
    %v820 = vcvt.s32.f32 %v564
    %v821 = vcvt.s32.f32 %v565
    %v822 = vcvt.s32.f32 %v566
    %v823 = vcvt.s32.f32 %v567
    %v824 = vcvt.s32.f32 %v568
    %v825 = vcvt.s32.f32 %v569
    %v826 = vcvt.s32.f32 %v570
    %v827 = vcvt.s32.f32 %v571
    %v828 = vcvt.s32.f32 %v572
    %v829 = vcvt.s32.f32 %v573
    %v830 = vcvt.s32.f32 %v574
    %v831 = vcvt.s32.f32 %v575
    %v832 = vcvt.s32.f32 %v576
    %v833 = vcvt.s32.f32 %v577
    %v834 = vcvt.s32.f32 %v578
    %v835 = vcvt.s32.f32 %v579
    %v836 = vcvt.s32.f32 %v580
    %v837 = vcvt.s32.f32 %v581
    %v838 = vcvt.s32.f32 %v582
    %v839 = vcvt.s32.f32 %v583
    %v840 = vcvt.s32.f32 %v584
    %v841 = vcvt.s32.f32 %v585
    %v842 = vcvt.s32.f32 %v586
    %v843 = vcvt.s32.f32 %v587
    %v844 = vcvt.s32.f32 %v588
    %v845 = vcvt.s32.f32 %v589
    %v846 = vcvt.s32.f32 %v590
    %v847 = vcvt.s32.f32 %v591
    %v848 = vcvt.s32.f32 %v592
    %v849 = vcvt.s32.f32 %v593
    %v850 = vld [vmem:[#allocation2] sm:$0xff]
    %v851 = vld [vmem:[#allocation2 + $0x8] sm:$0xff]
    %852 = vmatpush.msra.mxu0 %v714
    %853 = vmatpush.msra.mxu0 %v706
    %854 = vmatpush.msra.mxu0 %v698
    %855 = vmatpush.msra.mxu0 %v690
    %856 = vmatpush.msra.mxu0 %v682
    %857 = vmatpush.msra.mxu0 %v674
    %858 = vmatpush.msra.mxu0 %v666
    %859 = vmatpush.msra.mxu0 %v658
    %860 = vmatpush.msra.mxu0 %v650
    %861 = vmatpush.msra.mxu0 %v642
    %862 = vmatpush.msra.mxu0 %v634
    %863 = vmatpush.msra.mxu0 %v626
    %864 = vmatpush.msra.mxu0 %v618
    %865 = vmatpush.msra.mxu0 %v610
    %866 = vmatpush.msra.mxu0 %v602
    %867 = vmatpush.msra.mxu0 %v594
    %868 = vmatmul.f32.gmra.mxu0 %v850
    %v869 = vpop.f32.mrf.mxu0
    %v870 = vadd.f32 0.0, %v869
    %871 = vdwg.mxu0
    %872 = vmatpush.msra.mxu0 %v842
    %873 = vmatpush.msra.mxu0 %v834
    %874 = vmatpush.msra.mxu0 %v826
    %875 = vmatpush.msra.mxu0 %v818
    %876 = vmatpush.msra.mxu0 %v810
    %877 = vmatpush.msra.mxu0 %v802
    %878 = vmatpush.msra.mxu0 %v794
    %879 = vmatpush.msra.mxu0 %v786
    %880 = vmatpush.msra.mxu0 %v778
    %881 = vmatpush.msra.mxu0 %v770
    %882 = vmatpush.msra.mxu0 %v762
    %883 = vmatpush.msra.mxu0 %v754
    %884 = vmatpush.msra.mxu0 %v746
    %885 = vmatpush.msra.mxu0 %v738
    %886 = vmatpush.msra.mxu0 %v730
    %887 = vmatpush.msra.mxu0 %v722
    %888 = vmatmul.f32.gmra.mxu0 %v851
    %v889 = vpop.f32.mrf.mxu0
    %v890 = vadd.f32 %v870, %v889
    %891 = vdwg.mxu0
    %892 = vmatpush.msra.mxu0 %v715
    %893 = vmatpush.msra.mxu0 %v707
    %894 = vmatpush.msra.mxu0 %v699
    %895 = vmatpush.msra.mxu0 %v691
    %896 = vmatpush.msra.mxu0 %v683
    %897 = vmatpush.msra.mxu0 %v675
    %898 = vmatpush.msra.mxu0 %v667
    %899 = vmatpush.msra.mxu0 %v659
    %900 = vmatpush.msra.mxu0 %v651
    %901 = vmatpush.msra.mxu0 %v643
    %902 = vmatpush.msra.mxu0 %v635
    %903 = vmatpush.msra.mxu0 %v627
    %904 = vmatpush.msra.mxu0 %v619
    %905 = vmatpush.msra.mxu0 %v611
    %906 = vmatpush.msra.mxu0 %v603
    %907 = vmatpush.msra.mxu0 %v595
    %908 = vmatmul.f32.gmra.mxu0 %v850
    %v909 = vpop.f32.mrf.mxu0
    %v910 = vadd.f32 0.0, %v909
    %911 = vdwg.mxu0
    %912 = vmatpush.msra.mxu0 %v843
    %913 = vmatpush.msra.mxu0 %v835
    %914 = vmatpush.msra.mxu0 %v827
    %915 = vmatpush.msra.mxu0 %v819
    %916 = vmatpush.msra.mxu0 %v811
    %917 = vmatpush.msra.mxu0 %v803
    %918 = vmatpush.msra.mxu0 %v795
    %919 = vmatpush.msra.mxu0 %v787
    %920 = vmatpush.msra.mxu0 %v779
    %921 = vmatpush.msra.mxu0 %v771
    %922 = vmatpush.msra.mxu0 %v763
    %923 = vmatpush.msra.mxu0 %v755
    %924 = vmatpush.msra.mxu0 %v747
    %925 = vmatpush.msra.mxu0 %v739
    %926 = vmatpush.msra.mxu0 %v731
    %927 = vmatpush.msra.mxu0 %v723
    %928 = vmatmul.f32.gmra.mxu0 %v851
    %v929 = vpop.f32.mrf.mxu0
    %v930 = vadd.f32 %v910, %v929
    %931 = vdwg.mxu0
    %932 = vmatpush.msra.mxu0 %v716
    %933 = vmatpush.msra.mxu0 %v708
    %934 = vmatpush.msra.mxu0 %v700
    %935 = vmatpush.msra.mxu0 %v692
    %936 = vmatpush.msra.mxu0 %v684
    %937 = vmatpush.msra.mxu0 %v676
    %938 = vmatpush.msra.mxu0 %v668
    %939 = vmatpush.msra.mxu0 %v660
    %940 = vmatpush.msra.mxu0 %v652
    %941 = vmatpush.msra.mxu0 %v644
    %942 = vmatpush.msra.mxu0 %v636
    %943 = vmatpush.msra.mxu0 %v628
    %944 = vmatpush.msra.mxu0 %v620
    %945 = vmatpush.msra.mxu0 %v612
    %946 = vmatpush.msra.mxu0 %v604
    %947 = vmatpush.msra.mxu0 %v596
    %948 = vmatmul.f32.gmra.mxu0 %v850
    %v949 = vpop.f32.mrf.mxu0
    %v950 = vadd.f32 0.0, %v949
    %951 = vdwg.mxu0
    %952 = vmatpush.msra.mxu0 %v844
    %953 = vmatpush.msra.mxu0 %v836
    %954 = vmatpush.msra.mxu0 %v828
    %955 = vmatpush.msra.mxu0 %v820
    %956 = vmatpush.msra.mxu0 %v812
    %957 = vmatpush.msra.mxu0 %v804
    %958 = vmatpush.msra.mxu0 %v796
    %959 = vmatpush.msra.mxu0 %v788
    %960 = vmatpush.msra.mxu0 %v780
    %961 = vmatpush.msra.mxu0 %v772
    %962 = vmatpush.msra.mxu0 %v764
    %963 = vmatpush.msra.mxu0 %v756
    %964 = vmatpush.msra.mxu0 %v748
    %965 = vmatpush.msra.mxu0 %v740
    %966 = vmatpush.msra.mxu0 %v732
    %967 = vmatpush.msra.mxu0 %v724
    %968 = vmatmul.f32.gmra.mxu0 %v851
    %v969 = vpop.f32.mrf.mxu0
    %v970 = vadd.f32 %v950, %v969
    %971 = vdwg.mxu0
    %972 = vmatpush.msra.mxu0 %v717
    %973 = vmatpush.msra.mxu0 %v709
    %974 = vmatpush.msra.mxu0 %v701
    %975 = vmatpush.msra.mxu0 %v693
    %976 = vmatpush.msra.mxu0 %v685
    %977 = vmatpush.msra.mxu0 %v677
    %978 = vmatpush.msra.mxu0 %v669
    %979 = vmatpush.msra.mxu0 %v661
    %980 = vmatpush.msra.mxu0 %v653
    %981 = vmatpush.msra.mxu0 %v645
    %982 = vmatpush.msra.mxu0 %v637
    %983 = vmatpush.msra.mxu0 %v629
    %984 = vmatpush.msra.mxu0 %v621
    %985 = vmatpush.msra.mxu0 %v613
    %986 = vmatpush.msra.mxu0 %v605
    %987 = vmatpush.msra.mxu0 %v597
    %988 = vmatmul.f32.gmra.mxu0 %v850
    %v989 = vpop.f32.mrf.mxu0
    %v990 = vadd.f32 0.0, %v989
    %991 = vdwg.mxu0
    %992 = vmatpush.msra.mxu0 %v845
    %993 = vmatpush.msra.mxu0 %v837
    %994 = vmatpush.msra.mxu0 %v829
    %995 = vmatpush.msra.mxu0 %v821
    %996 = vmatpush.msra.mxu0 %v813
    %997 = vmatpush.msra.mxu0 %v805
    %998 = vmatpush.msra.mxu0 %v797
    %999 = vmatpush.msra.mxu0 %v789
    %1000 = vmatpush.msra.mxu0 %v781
    %1001 = vmatpush.msra.mxu0 %v773
    %1002 = vmatpush.msra.mxu0 %v765
    %1003 = vmatpush.msra.mxu0 %v757
    %1004 = vmatpush.msra.mxu0 %v749
    %1005 = vmatpush.msra.mxu0 %v741
    %1006 = vmatpush.msra.mxu0 %v733
    %1007 = vmatpush.msra.mxu0 %v725
    %1008 = vmatmul.f32.gmra.mxu0 %v851
    %v1009 = vpop.f32.mrf.mxu0
    %v1010 = vadd.f32 %v990, %v1009
    %1011 = vdwg.mxu0
    %1012 = vmatpush.msra.mxu0 %v718
    %1013 = vmatpush.msra.mxu0 %v710
    %1014 = vmatpush.msra.mxu0 %v702
    %1015 = vmatpush.msra.mxu0 %v694
    %1016 = vmatpush.msra.mxu0 %v686
    %1017 = vmatpush.msra.mxu0 %v678
    %1018 = vmatpush.msra.mxu0 %v670
    %1019 = vmatpush.msra.mxu0 %v662
    %1020 = vmatpush.msra.mxu0 %v654
    %1021 = vmatpush.msra.mxu0 %v646
    %1022 = vmatpush.msra.mxu0 %v638
    %1023 = vmatpush.msra.mxu0 %v630
    %1024 = vmatpush.msra.mxu0 %v622
    %1025 = vmatpush.msra.mxu0 %v614
    %1026 = vmatpush.msra.mxu0 %v606
    %1027 = vmatpush.msra.mxu0 %v598
    %1028 = vmatmul.f32.gmra.mxu0 %v850
    %v1029 = vpop.f32.mrf.mxu0
    %v1030 = vadd.f32 0.0, %v1029
    %1031 = vdwg.mxu0
    %1032 = vmatpush.msra.mxu0 %v846
    %1033 = vmatpush.msra.mxu0 %v838
    %1034 = vmatpush.msra.mxu0 %v830
    %1035 = vmatpush.msra.mxu0 %v822
    %1036 = vmatpush.msra.mxu0 %v814
    %1037 = vmatpush.msra.mxu0 %v806
    %1038 = vmatpush.msra.mxu0 %v798
    %1039 = vmatpush.msra.mxu0 %v790
    %1040 = vmatpush.msra.mxu0 %v782
    %1041 = vmatpush.msra.mxu0 %v774
    %1042 = vmatpush.msra.mxu0 %v766
    %1043 = vmatpush.msra.mxu0 %v758
    %1044 = vmatpush.msra.mxu0 %v750
    %1045 = vmatpush.msra.mxu0 %v742
    %1046 = vmatpush.msra.mxu0 %v734
    %1047 = vmatpush.msra.mxu0 %v726
    %1048 = vmatmul.f32.gmra.mxu0 %v851
    %v1049 = vpop.f32.mrf.mxu0
    %v1050 = vadd.f32 %v1030, %v1049
    %1051 = vdwg.mxu0
    %1052 = vmatpush.msra.mxu0 %v719
    %1053 = vmatpush.msra.mxu0 %v711
    %1054 = vmatpush.msra.mxu0 %v703
    %1055 = vmatpush.msra.mxu0 %v695
    %1056 = vmatpush.msra.mxu0 %v687
    %1057 = vmatpush.msra.mxu0 %v679
    %1058 = vmatpush.msra.mxu0 %v671
    %1059 = vmatpush.msra.mxu0 %v663
    %1060 = vmatpush.msra.mxu0 %v655
    %1061 = vmatpush.msra.mxu0 %v647
    %1062 = vmatpush.msra.mxu0 %v639
    %1063 = vmatpush.msra.mxu0 %v631
    %1064 = vmatpush.msra.mxu0 %v623
    %1065 = vmatpush.msra.mxu0 %v615
    %1066 = vmatpush.msra.mxu0 %v607
    %1067 = vmatpush.msra.mxu0 %v599
    %1068 = vmatmul.f32.gmra.mxu0 %v850
    %v1069 = vpop.f32.mrf.mxu0
    %v1070 = vadd.f32 0.0, %v1069
    %1071 = vdwg.mxu0
    %1072 = vmatpush.msra.mxu0 %v847
    %1073 = vmatpush.msra.mxu0 %v839
    %1074 = vmatpush.msra.mxu0 %v831
    %1075 = vmatpush.msra.mxu0 %v823
    %1076 = vmatpush.msra.mxu0 %v815
    %1077 = vmatpush.msra.mxu0 %v807
    %1078 = vmatpush.msra.mxu0 %v799
    %1079 = vmatpush.msra.mxu0 %v791
    %1080 = vmatpush.msra.mxu0 %v783
    %1081 = vmatpush.msra.mxu0 %v775
    %1082 = vmatpush.msra.mxu0 %v767
    %1083 = vmatpush.msra.mxu0 %v759
    %1084 = vmatpush.msra.mxu0 %v751
    %1085 = vmatpush.msra.mxu0 %v743
    %1086 = vmatpush.msra.mxu0 %v735
    %1087 = vmatpush.msra.mxu0 %v727
    %1088 = vmatmul.f32.gmra.mxu0 %v851
    %v1089 = vpop.f32.mrf.mxu0
    %v1090 = vadd.f32 %v1070, %v1089
    %1091 = vdwg.mxu0
    %1092 = vmatpush.msra.mxu0 %v720
    %1093 = vmatpush.msra.mxu0 %v712
    %1094 = vmatpush.msra.mxu0 %v704
    %1095 = vmatpush.msra.mxu0 %v696
    %1096 = vmatpush.msra.mxu0 %v688
    %1097 = vmatpush.msra.mxu0 %v680
    %1098 = vmatpush.msra.mxu0 %v672
    %1099 = vmatpush.msra.mxu0 %v664
    %1100 = vmatpush.msra.mxu0 %v656
    %1101 = vmatpush.msra.mxu0 %v648
    %1102 = vmatpush.msra.mxu0 %v640
    %1103 = vmatpush.msra.mxu0 %v632
    %1104 = vmatpush.msra.mxu0 %v624
    %1105 = vmatpush.msra.mxu0 %v616
    %1106 = vmatpush.msra.mxu0 %v608
    %1107 = vmatpush.msra.mxu0 %v600
    %1108 = vmatmul.f32.gmra.mxu0 %v850
    %v1109 = vpop.f32.mrf.mxu0
    %v1110 = vadd.f32 0.0, %v1109
    %1111 = vdwg.mxu0
    %1112 = vmatpush.msra.mxu0 %v848
    %1113 = vmatpush.msra.mxu0 %v840
    %1114 = vmatpush.msra.mxu0 %v832
    %1115 = vmatpush.msra.mxu0 %v824
    %1116 = vmatpush.msra.mxu0 %v816
    %1117 = vmatpush.msra.mxu0 %v808
    %1118 = vmatpush.msra.mxu0 %v800
    %1119 = vmatpush.msra.mxu0 %v792
    %1120 = vmatpush.msra.mxu0 %v784
    %1121 = vmatpush.msra.mxu0 %v776
    %1122 = vmatpush.msra.mxu0 %v768
    %1123 = vmatpush.msra.mxu0 %v760
    %1124 = vmatpush.msra.mxu0 %v752
    %1125 = vmatpush.msra.mxu0 %v744
    %1126 = vmatpush.msra.mxu0 %v736
    %1127 = vmatpush.msra.mxu0 %v728
    %1128 = vmatmul.f32.gmra.mxu0 %v851
    %v1129 = vpop.f32.mrf.mxu0
    %v1130 = vadd.f32 %v1110, %v1129
    %1131 = vdwg.mxu0
    %1132 = vmatpush.msra.mxu0 %v721
    %1133 = vmatpush.msra.mxu0 %v713
    %1134 = vmatpush.msra.mxu0 %v705
    %1135 = vmatpush.msra.mxu0 %v697
    %1136 = vmatpush.msra.mxu0 %v689
    %1137 = vmatpush.msra.mxu0 %v681
    %1138 = vmatpush.msra.mxu0 %v673
    %1139 = vmatpush.msra.mxu0 %v665
    %1140 = vmatpush.msra.mxu0 %v657
    %1141 = vmatpush.msra.mxu0 %v649
    %1142 = vmatpush.msra.mxu0 %v641
    %1143 = vmatpush.msra.mxu0 %v633
    %1144 = vmatpush.msra.mxu0 %v625
    %1145 = vmatpush.msra.mxu0 %v617
    %1146 = vmatpush.msra.mxu0 %v609
    %1147 = vmatpush.msra.mxu0 %v601
    %1148 = vmatmul.f32.gmra.mxu0 %v850
    %v1149 = vpop.f32.mrf.mxu0
    %v1150 = vadd.f32 0.0, %v1149
    %1151 = vdwg.mxu0
    %1152 = vmatpush.msra.mxu0 %v849
    %1153 = vmatpush.msra.mxu0 %v841
    %1154 = vmatpush.msra.mxu0 %v833
    %1155 = vmatpush.msra.mxu0 %v825
    %1156 = vmatpush.msra.mxu0 %v817
    %1157 = vmatpush.msra.mxu0 %v809
    %1158 = vmatpush.msra.mxu0 %v801
    %1159 = vmatpush.msra.mxu0 %v793
    %1160 = vmatpush.msra.mxu0 %v785
    %1161 = vmatpush.msra.mxu0 %v777
    %1162 = vmatpush.msra.mxu0 %v769
    %1163 = vmatpush.msra.mxu0 %v761
    %1164 = vmatpush.msra.mxu0 %v753
    %1165 = vmatpush.msra.mxu0 %v745
    %1166 = vmatpush.msra.mxu0 %v737
    %1167 = vmatpush.msra.mxu0 %v729
    %1168 = vmatmul.f32.gmra.mxu0 %v851
    %v1169 = vpop.f32.mrf.mxu0
    %v1170 = vadd.f32 %v1150, %v1169
    %1171 = vdwg.mxu0
    %1172 = vst [vmem:[#allocation7] sm:$0xff] %v890
    %1173 = vst [vmem:[#allocation7 + $0x8] sm:$0xff] %v930
    %1174 = vst [vmem:[#allocation7 + $0x10] sm:$0xff] %v970
    %1175 = vst [vmem:[#allocation7 + $0x18] sm:$0xff] %v1010
    %1176 = vst [vmem:[#allocation7 + $0x20] sm:$0xff] %v1050
    %1177 = vst [vmem:[#allocation7 + $0x28] sm:$0xff] %v1090
    %1178 = vst [vmem:[#allocation7 + $0x30] sm:$0xff] %v1130
    %1179 = vst [vmem:[#allocation7 + $0x38] sm:$0xff] %v1170
    // Predicated region
    $region18: #{tpu_custom_call.1} parent=1 // pred_check
      _
    $region19: #{tpu_custom_call.1} parent=1 // pred_check_branch
      %1181 = sbr.rel (0) target = $region21
    $region20: #{tpu_custom_call.1} parent=1 // pred_region
      %1183 = vsyncadd [#allocation4], 0
      %s1185 = sshll.u32 [#allocation7], 4
      %s1186 = int_to_ptr.vmem [resolvable:$true] %s1185
      %s1187 = sshll.u32 %s2, 4
      %s1188 = int_to_ptr.hbm [resolvable:$true] %s1187
      %1190 = dma.vmem_to_hbm [thread:$0]  %s1186, 1024, %s1188, [#allocation4]
    $region21: #{tpu_custom_call.1} parent=1 // pred_fallthru
      _
    // Predicated region
    $region22: #{tpu_custom_call.1} parent=1 // pred_check
      _
    $region23: #{tpu_custom_call.1} parent=1 // pred_check_branch
      %1192 = sbr.rel (0) target = $region25
    $region24: #{tpu_custom_call.1} parent=1 // pred_region
      %1194 = dma.done [#allocation4], 1024
    $region25: #{tpu_custom_call.1} parent=1 // pred_fallthru
      _
    %1195 = vsyncpa [#allocation3], 1
    %1196 = vsyncpa [#allocation6], 1
    %1197 = vsyncpa [#allocation4], 1

</llo_original>
